<compile_context>
chip_gen: v5e
topology: v5e:2x2
jax: 0.10.0
libtpu: 0.0.40
codegen_flags: <defaults>
</compile_context>

<pallas_src>
import jax
import jax.numpy as jnp
from jax.experimental import pallas as pl
from jax.experimental.pallas import tpu as pltpu


# ----------------------------------------------------------------------------
# Shared GRU recurrence (single batch-chunk, in-kernel time loop)
# ----------------------------------------------------------------------------
def _gru_recurrence(x_ref, wih_ref, whh_ref, bih_ref, bhn_ref, gates_s, store_h):
    """x_ref: (T, Bc, D_in); gates_s: (T*Bc, 3*Hp) scratch; h carried in vregs."""
    T, Bc, d_in = x_ref.shape
    Hp = whh_ref.shape[0]

    # ---- fused, hoisted input projection over ALL timesteps (one MXU pass).
    # Column layout [r | z | n]; b_hr/b_hz are already folded into bih_ref.
    x_all = x_ref[...].reshape(T * Bc, d_in)
    gates_s[...] = (jnp.dot(x_all, wih_ref[...],
                            preferred_element_type=jnp.float32)
                    + bih_ref[...])

    whh = whh_ref[...]                       # (Hp, 3*Hp) resident for the loop
    b_hn = bhn_ref[...]                      # (1, Hp)

    def step(t, h_prev):
        row = pl.multiple_of(t * Bc, Bc)
        g = gates_s[pl.ds(row, Bc), :]       # (Bc, 3Hp) precomputed input gates
        # single fused recurrent matmul per timestep (the critical-path op):
        gh = jnp.dot(h_prev, whh, preferred_element_type=jnp.float32)
        # PyTorch GRU gate order [reset, update, new]:
        r = jax.nn.sigmoid(g[:, :Hp] + gh[:, :Hp])
        z = jax.nn.sigmoid(g[:, Hp:2 * Hp] + gh[:, Hp:2 * Hp])
        n = jnp.tanh(g[:, 2 * Hp:] + r * (gh[:, 2 * Hp:] + b_hn))
        h_new = (1.0 - z) * n + z * h_prev
        store_h(t, row, h_new)
        return h_new

    h0 = jnp.zeros((Bc, Hp), jnp.float32)
    jax.lax.fori_loop(0, T, step, h0, unroll=min(T, 8))


def _gru_layer_kernel(x_ref, wih_ref, whh_ref, bih_ref, bhn_ref,
                      h_out_ref, gates_s):
    """Non-final GRU layer: emits the full hidden sequence (T, Bc, Hp)."""
    def store_h(t, row, h_new):
        h_out_ref[t] = h_new

    _gru_recurrence(x_ref, wih_ref, whh_ref, bih_ref, bhn_ref, gates_s, store_h)


def _gru_head_kernel(x_ref, wih_ref, whh_ref, bih_ref, bhn_ref,
                     wout_ref, bout_ref, o_ref, gates_s):
    """Final GRU layer with the Linear + sigmoid head fused in the epilogue."""
    T, Bc, _ = x_ref.shape
    Hp = whh_ref.shape[0]

    def store_h(t, row, h_new):
        # Reuse the consumed (dead) r-gate columns of the slab as hseq storage:
        # step t only ever reads rows [row, row+Bc) before this write, and all
        # later steps read strictly later rows.
        gates_s[pl.ds(row, Bc), :Hp] = h_new

    _gru_recurrence(x_ref, wih_ref, whh_ref, bih_ref, bhn_ref, gates_s, store_h)

    # One (T*Bc, Hp) x (Hp, out_pad) matmul + sigmoid; lane-dense output.
    hseq = gates_s[:, :Hp]
    y = (jnp.dot(hseq, wout_ref[...], preferred_element_type=jnp.float32)
         + bout_ref[...])
    o_ref[...] = jax.nn.sigmoid(y).reshape(T, Bc, -1)


# ----------------------------------------------------------------------------
# Host-side weight prep / wrappers
# ----------------------------------------------------------------------------
def _prep_gru_weights(w_ih, b_ih, w_hh, b_hh, d_in_feed, Hp):
    """PyTorch (3H, *) layouts -> fused, lane-padded (d_in_feed, 3Hp)/(Hp, 3Hp)."""
    w_ih = jnp.asarray(w_ih, jnp.float32)
    w_hh = jnp.asarray(w_hh, jnp.float32)
    b_ih = jnp.asarray(b_ih, jnp.float32)
    b_hh = jnp.asarray(b_hh, jnp.float32)
    H = w_hh.shape[1]
    d_in = w_ih.shape[1]

    wih_g = w_ih.reshape(3, H, d_in)        # gate order [r, z, n]
    whh_g = w_hh.reshape(3, H, H)
    bih_g = b_ih.reshape(3, H)
    bhh_g = b_hh.reshape(3, H)

    wih_cat = jnp.zeros((d_in_feed, 3 * Hp), jnp.float32)
    whh_cat = jnp.zeros((Hp, 3 * Hp), jnp.float32)
    bin_cat = jnp.zeros((1, 3 * Hp), jnp.float32)
    for g in range(3):
        wih_cat = wih_cat.at[:d_in, g * Hp:g * Hp + H].set(wih_g[g].T)
        whh_cat = whh_cat.at[:H, g * Hp:g * Hp + H].set(whh_g[g].T)
    # r/z columns absorb b_hh (they sit outside the r*(...) product); the n
    # column keeps only b_in -- b_hn must stay inside the recurrence.
    bin_cat = bin_cat.at[0, 0 * Hp:0 * Hp + H].set(bih_g[0] + bhh_g[0])
    bin_cat = bin_cat.at[0, 1 * Hp:1 * Hp + H].set(bih_g[1] + bhh_g[1])
    bin_cat = bin_cat.at[0, 2 * Hp:2 * Hp + H].set(bih_g[2])
    bhn = jnp.zeros((1, Hp), jnp.float32).at[0, :H].set(bhh_g[2])
    return wih_cat, whh_cat, bin_cat, bhn


def _vmem_limit(block_f32_elems, scratch_f32_elems):
    """Explicit scoped-VMEM budget: 2x (double-buffered) blocks + scratch + headroom."""
    bytes_ = (2 * block_f32_elems + scratch_f32_elems) * 4 + (2 << 20)
    return int(min(bytes_, 120 << 20))


def gru_layer(x, w_ih, b_ih, w_hh, b_hh, Hp, Bc=8):
    """One (non-final) GRU layer.  x: (T, Bp, D_in) time-major, zero-padded.
    Returns (T, Bp, Hp) with padded lanes == 0."""
    T, Bp, d_in = x.shape
    wih_c, whh_c, bin_c, bhn = _prep_gru_weights(w_ih, b_ih, w_hh, b_hh, d_in, Hp)
    block_elems = (T * Bc * d_in + d_in * 3 * Hp + Hp * 3 * Hp + 3 * Hp + Hp
                   + T * Bc * Hp)
    scratch_elems = T * Bc * 3 * Hp
    return pl.pallas_call(
        _gru_layer_kernel,
        out_shape=jax.ShapeDtypeStruct((T, Bp, Hp), jnp.float32),
        grid_spec=pltpu.PrefetchScalarGridSpec(
            num_scalar_prefetch=0,
            grid=(Bp // Bc,),
            in_specs=[
                pl.BlockSpec((T, Bc, d_in), lambda b: (0, b, 0)),
                pl.BlockSpec((d_in, 3 * Hp), lambda b: (0, 0)),
                pl.BlockSpec((Hp, 3 * Hp), lambda b: (0, 0)),
                pl.BlockSpec((1, 3 * Hp), lambda b: (0, 0)),
                pl.BlockSpec((1, Hp), lambda b: (0, 0)),
            ],
            out_specs=pl.BlockSpec((T, Bc, Hp), lambda b: (0, b, 0)),
            scratch_shapes=[pltpu.VMEM((T * Bc, 3 * Hp), jnp.float32)],
        ),
        compiler_params=pltpu.CompilerParams(
            dimension_semantics=("parallel",),
            vmem_limit_bytes=_vmem_limit(block_elems, scratch_elems)),
    )(x, wih_c, whh_c, bin_c, bhn)


def gru_head(x, w_ih, b_ih, w_hh, b_hh, w_out, b_out, Hp, out_pad, Bc=8):
    """Final GRU layer + fused Linear + sigmoid.  Returns (T, Bp, out_pad)."""
    T, Bp, d_in = x.shape
    H = w_hh.shape[1]
    out_dim = w_out.shape[0]
    wih_c, whh_c, bin_c, bhn = _prep_gru_weights(w_ih, b_ih, w_hh, b_hh, d_in, Hp)
    wout_p = jnp.zeros((Hp, out_pad), jnp.float32).at[:H, :out_dim].set(
        jnp.asarray(w_out, jnp.float32).T)
    bout_p = jnp.zeros((1, out_pad), jnp.float32).at[0, :out_dim].set(
        jnp.asarray(b_out, jnp.float32))
    block_elems = (T * Bc * d_in + d_in * 3 * Hp + Hp * 3 * Hp + 3 * Hp + Hp
                   + Hp * out_pad + out_pad + T * Bc * out_pad)
    scratch_elems = T * Bc * 3 * Hp
    return pl.pallas_call(
        _gru_head_kernel,
        out_shape=jax.ShapeDtypeStruct((T, Bp, out_pad), jnp.float32),
        grid_spec=pltpu.PrefetchScalarGridSpec(
            num_scalar_prefetch=0,
            grid=(Bp // Bc,),
            in_specs=[
                pl.BlockSpec((T, Bc, d_in), lambda b: (0, b, 0)),
                pl.BlockSpec((d_in, 3 * Hp), lambda b: (0, 0)),
                pl.BlockSpec((Hp, 3 * Hp), lambda b: (0, 0)),
                pl.BlockSpec((1, 3 * Hp), lambda b: (0, 0)),
                pl.BlockSpec((1, Hp), lambda b: (0, 0)),
                pl.BlockSpec((Hp, out_pad), lambda b: (0, 0)),
                pl.BlockSpec((1, out_pad), lambda b: (0, 0)),
            ],
            out_specs=pl.BlockSpec((T, Bc, out_pad), lambda b: (0, b, 0)),
            scratch_shapes=[pltpu.VMEM((T * Bc, 3 * Hp), jnp.float32)],
        ),
        compiler_params=pltpu.CompilerParams(
            dimension_semantics=("parallel",),
            vmem_limit_bytes=_vmem_limit(block_elems, scratch_elems)),
    )(x, wih_c, whh_c, bin_c, bhn, wout_p, bout_p)


# ----------------------------------------------------------------------------
# Parameter init / forward / loss
# ----------------------------------------------------------------------------
def init_discriminator_params(key, input_dim, hidden_dim, out_dim, num_layers):
    """Deterministic init matching PyTorch shapes (uniform +-1/sqrt(H))."""
    params = {"gru": [], "num_layers": num_layers}
    k = 1.0 / jnp.sqrt(hidden_dim)
    for layer in range(num_layers):
        d_in = input_dim if layer == 0 else hidden_dim
        key, k1, k2, k3, k4 = jax.random.split(key, 5)
        params["gru"].append({
            "w_ih": jax.random.uniform(k1, (3 * hidden_dim, d_in), jnp.float32, -k, k),
            "w_hh": jax.random.uniform(k2, (3 * hidden_dim, hidden_dim), jnp.float32, -k, k),
            "b_ih": jax.random.uniform(k3, (3 * hidden_dim,), jnp.float32, -k, k),
            "b_hh": jax.random.uniform(k4, (3 * hidden_dim,), jnp.float32, -k, k),
        })
    key, k5, k6 = jax.random.split(key, 3)
    params["w_out"] = jax.random.uniform(k5, (out_dim, hidden_dim), jnp.float32, -k, k)
    params["b_out"] = jax.random.uniform(k6, (out_dim,), jnp.float32, -k, k)
    return params


def discriminator_forward(params, x, alpha=1.0, epoch=0):
    """x: (B, T, input_dim), batch_first like PyTorch.  Returns (B, T, out_dim)."""
    del alpha, epoch                      # GradReverse is identity in forward
    x = jnp.asarray(x, jnp.float32)
    B, T, _ = x.shape
    Bc = 8                                # batch chunk (one grid step / TC)
    Bp = ((B + Bc - 1) // Bc) * Bc
    H = params["gru"][0]["w_hh"].shape[1]
    Hp = ((H + 127) // 128) * 128         # lane-dense hidden dim

    y = jnp.transpose(x, (1, 0, 2))       # time-major (T, B, D)
    if Bp != B:
        y = jnp.pad(y, ((0, 0), (0, Bp - B), (0, 0)))

    # TODO(synk): for large T, tile the time axis (stream x / gate slab from
    # HBM with emit_pipeline) to stay inside v7x's 64 MiB VMEM; at these
    # sizes all slabs are resident.
    for lp in params["gru"][:-1]:
        y = gru_layer(y, lp["w_ih"], lp["b_ih"], lp["w_hh"], lp["b_hh"], Hp, Bc)

    lp = params["gru"][-1]
    out_dim = params["w_out"].shape[0]
    out_pad = ((out_dim + 127) // 128) * 128
    # TODO(synk): when out_dim == 1 and T*Bp is large, lay the head output
    # with T on the lane axis instead of zero-padding out_dim to 128.
    out = gru_head(y, lp["w_ih"], lp["b_ih"], lp["w_hh"], lp["b_hh"],
                   params["w_out"], params["b_out"], Hp, out_pad, Bc)

    out = out[:, :B, :out_dim]            # drop padded batch rows / lanes
    return jnp.transpose(out, (1, 0, 2))  # back to (B, T, out_dim)


def discriminator_loss(pred, label):
    """BCELoss(reduction='sum') / batch_size, same as the PyTorch static method."""
    eps = 1e-12
    bce = -(label * jnp.log(pred + eps) + (1.0 - label) * jnp.log(1.0 - pred + eps))
    return jnp.sum(bce) / pred.shape[0]


# ----------------------------------------------------------------------------
# Pure-JAX reference (for numerical validation of the Pallas kernels)
# ----------------------------------------------------------------------------
def _reference_forward(params, x):
    B, T, _ = x.shape
    y = jnp.asarray(x, jnp.float32)
    for lp in params["gru"]:
        w_ih, w_hh = lp["w_ih"], lp["w_hh"]
        b_ih, b_hh = lp["b_ih"], lp["b_hh"]
        H = w_hh.shape[1]

        def cell(h, x_t):
            gi = x_t @ w_ih.T + b_ih
            gh = h @ w_hh.T + b_hh
            i_r, i_z, i_n = jnp.split(gi, 3, axis=-1)
            h_r, h_z, h_n = jnp.split(gh, 3, axis=-1)
            r = jax.nn.sigmoid(i_r + h_r)
            z = jax.nn.sigmoid(i_z + h_z)
            n = jnp.tanh(i_n + r * h_n)
            h_new = (1.0 - z) * n + z * h
            return h_new, h_new

        h0 = jnp.zeros((B, H), jnp.float32)
        _, ys = jax.lax.scan(cell, h0, jnp.transpose(y, (1, 0, 2)))
        y = jnp.transpose(ys, (1, 0, 2))
    return jax.nn.sigmoid(y @ params["w_out"].T + params["b_out"])


if __name__ == "__main__":
    # Small deterministic example consistent with the module:
    # input_dim=4, hidden_dim=32, out_dim=1, batch=2, seq_len=8.
    B, T, INPUT_DIM, HIDDEN_DIM, OUT_DIM = 2, 8, 4, 32, 1

    key = jax.random.PRNGKey(0)
    key, kx = jax.random.split(key)
    x = jax.random.normal(kx, (B, T, INPUT_DIM), jnp.float32)

    fwd = jax.jit(discriminator_forward)

    dis_x = None
    for d_layer in (1, 2):   # exercise both the fused-head and stacked paths
        params = init_discriminator_params(
            jax.random.PRNGKey(d_layer), INPUT_DIM, HIDDEN_DIM, OUT_DIM, d_layer)
        dis_x = jax.block_until_ready(fwd(params, x))

        assert dis_x.shape == (B, T, OUT_DIM)
        assert bool(jnp.all(jnp.isfinite(dis_x)))
        assert bool(jnp.all((dis_x > 0.0) & (dis_x < 1.0)))  # sigmoid range

        ref = jax.block_until_ready(_reference_forward(params, x))
        max_err = float(jnp.max(jnp.abs(dis_x - ref)))
        assert max_err < 1e-3, f"d_layer={d_layer}: max err vs reference {max_err}"

    # exercise the loss helper too
    label = jnp.ones_like(dis_x)
    _ = jax.block_until_ready(discriminator_loss(dis_x, label))

    print("KERNEL_OK")
</pallas_src>

<mosaic_0001>
module attributes {stable_mosaic.version = 11 : i64} {
  func.func @_gru_head_kernel(%arg0: i32, %arg1: memref<8x8x4xf32, #tpu.memory_space<vmem>>, %arg2: memref<4x384xf32, #tpu.memory_space<vmem>>, %arg3: memref<128x384xf32, #tpu.memory_space<vmem>>, %arg4: memref<1x384xf32, #tpu.memory_space<vmem>>, %arg5: memref<1x128xf32, #tpu.memory_space<vmem>>, %arg6: memref<128x128xf32, #tpu.memory_space<vmem>>, %arg7: memref<1x128xf32, #tpu.memory_space<vmem>>, %arg8: memref<8x8x128xf32, #tpu.memory_space<vmem>>, %arg9: memref<64x384xf32, #tpu.memory_space<vmem>>) attributes {dimension_semantics = [#tpu.dimension_semantics<parallel>], iteration_bounds = array<i64: 1>, scalar_prefetch = 0 : i64, scratch_operands = 1 : i64, tpu.core_type = #tpu.core_type<tc>, window_params = [{transform_indices = @transform_0, window_bounds = array<i64: 8, 8, 4>}, {pipeline_mode = #tpu.pipeline_mode<synchronous>, transform_indices = @transform_1, window_bounds = array<i64: 4, 384>}, {pipeline_mode = #tpu.pipeline_mode<synchronous>, transform_indices = @transform_2, window_bounds = array<i64: 128, 384>}, {pipeline_mode = #tpu.pipeline_mode<synchronous>, transform_indices = @transform_3, window_bounds = array<i64: 1, 384>}, {pipeline_mode = #tpu.pipeline_mode<synchronous>, transform_indices = @transform_4, window_bounds = array<i64: 1, 128>}, {pipeline_mode = #tpu.pipeline_mode<synchronous>, transform_indices = @transform_5, window_bounds = array<i64: 128, 128>}, {pipeline_mode = #tpu.pipeline_mode<synchronous>, transform_indices = @transform_6, window_bounds = array<i64: 1, 128>}, {transform_indices = @transform_7, window_bounds = array<i64: 8, 8, 128>}]} {
    %c0 = arith.constant 0 : index
    %c0_0 = arith.constant 0 : index
    %c0_1 = arith.constant 0 : index
    %0 = vector.load %arg1[%c0, %c0_0, %c0_1] : memref<8x8x4xf32, #tpu.memory_space<vmem>>, vector<8x8x4xf32>
    %1 = vector.shape_cast %0 : vector<8x8x4xf32> to vector<64x4xf32>
    %c0_2 = arith.constant 0 : index
    %c0_3 = arith.constant 0 : index
    %2 = vector.load %arg2[%c0_2, %c0_3] : memref<4x384xf32, #tpu.memory_space<vmem>>, vector<4x384xf32>
    %cst = arith.constant dense<0.000000e+00> : vector<64x384xf32>
    %3 = tpu.matmul %1, %2, %cst {dimension_numbers = #tpu.dot_dimension_numbers<[1], [0], [0], [1], [0, 0, 1, 1], [], []>} : vector<64x4xf32>, vector<4x384xf32>, vector<64x384xf32> -> vector<64x384xf32>
    %c0_4 = arith.constant 0 : index
    %c0_5 = arith.constant 0 : index
    %4 = vector.load %arg4[%c0_4, %c0_5] : memref<1x384xf32, #tpu.memory_space<vmem>>, vector<1x384xf32>
    %5 = vector.broadcast %4 : vector<1x384xf32> to vector<64x384xf32>
    %6 = arith.addf %3, %5 : vector<64x384xf32>
    %c0_6 = arith.constant 0 : index
    %c0_7 = arith.constant 0 : index
    %7 = vector.load %arg9[%c0_6, %c0_7] : memref<64x384xf32, #tpu.memory_space<vmem>>, vector<64x384xf32>
    tpu.vector_store %arg9[%c0_6, %c0_7], %6 {strides = array<i32>} : memref<64x384xf32, #tpu.memory_space<vmem>>, vector<64x384xf32>,
    %c0_8 = arith.constant 0 : index
    %c0_9 = arith.constant 0 : index
    %8 = vector.load %arg3[%c0_8, %c0_9] : memref<128x384xf32, #tpu.memory_space<vmem>>, vector<128x384xf32>
    %c0_10 = arith.constant 0 : index
    %c0_11 = arith.constant 0 : index
    %9 = vector.load %arg5[%c0_10, %c0_11] : memref<1x128xf32, #tpu.memory_space<vmem>>, vector<1x128xf32>
    %cst_12 = arith.constant 0.000000e+00 : f32
    %10 = vector.broadcast %cst_12 : f32 to vector<8x128xf32>
    %c0_i32 = arith.constant 0 : i32
    %c8_i32 = arith.constant 8 : i32
    %11 = arith.muli %c0_i32, %c8_i32 : i32
    %12 = tpu.assume_multiple %11, 8 : i32
    %13 = arith.index_cast %12 : i32 to index
    %c0_13 = arith.constant 0 : index
    %14 = vector.load %arg9[%13, %c0_13] : memref<64x384xf32, #tpu.memory_space<vmem>>, vector<8x384xf32>
    %cst_14 = arith.constant dense<0.000000e+00> : vector<8x384xf32>
    %15 = tpu.matmul %10, %8, %cst_14 {dimension_numbers = #tpu.dot_dimension_numbers<[1], [0], [0], [1], [0, 0, 1, 1], [], []>} : vector<8x128xf32>, vector<128x384xf32>, vector<8x384xf32> -> vector<8x384xf32>
    %16 = vector.extract_strided_slice %14 {offsets = [0, 0], sizes = [8, 128], strides = [1, 1]} : vector<8x384xf32> to vector<8x128xf32>
    %17 = vector.extract_strided_slice %15 {offsets = [0, 0], sizes = [8, 128], strides = [1, 1]} : vector<8x384xf32> to vector<8x128xf32>
    %18 = arith.addf %16, %17 : vector<8x128xf32>
    %19 = arith.negf %18 : vector<8x128xf32>
    %20 = math.exp %19 : vector<8x128xf32>
    %cst_15 = arith.constant 1.000000e+00 : f32
    %21 = vector.broadcast %cst_15 : f32 to vector<8x128xf32>
    %22 = arith.addf %21, %20 : vector<8x128xf32>
    %23 = arith.divf %21, %22 : vector<8x128xf32>
    %24 = vector.extract_strided_slice %14 {offsets = [0, 128], sizes = [8, 128], strides = [1, 1]} : vector<8x384xf32> to vector<8x128xf32>
    %25 = vector.extract_strided_slice %15 {offsets = [0, 128], sizes = [8, 128], strides = [1, 1]} : vector<8x384xf32> to vector<8x128xf32>
    %26 = arith.addf %24, %25 : vector<8x128xf32>
    %27 = arith.negf %26 : vector<8x128xf32>
    %28 = math.exp %27 : vector<8x128xf32>
    %cst_16 = arith.constant 1.000000e+00 : f32
    %29 = vector.broadcast %cst_16 : f32 to vector<8x128xf32>
    %30 = arith.addf %29, %28 : vector<8x128xf32>
    %31 = arith.divf %29, %30 : vector<8x128xf32>
    %32 = vector.extract_strided_slice %14 {offsets = [0, 256], sizes = [8, 128], strides = [1, 1]} : vector<8x384xf32> to vector<8x128xf32>
    %33 = vector.extract_strided_slice %15 {offsets = [0, 256], sizes = [8, 128], strides = [1, 1]} : vector<8x384xf32> to vector<8x128xf32>
    %34 = vector.broadcast %9 : vector<1x128xf32> to vector<8x128xf32>
    %35 = arith.addf %33, %34 : vector<8x128xf32>
    %36 = arith.mulf %23, %35 : vector<8x128xf32>
    %37 = arith.addf %32, %36 : vector<8x128xf32>
    %38 = math.tanh %37 : vector<8x128xf32>
    %cst_17 = arith.constant 1.000000e+00 : f32
    %39 = vector.broadcast %cst_17 : f32 to vector<8x128xf32>
    %40 = arith.subf %39, %31 : vector<8x128xf32>
    %41 = arith.mulf %40, %38 : vector<8x128xf32>
    %42 = arith.mulf %31, %10 : vector<8x128xf32>
    %43 = arith.addf %41, %42 : vector<8x128xf32>
    %44 = arith.index_cast %12 : i32 to index
    %c0_18 = arith.constant 0 : index
    %45 = vector.load %arg9[%44, %c0_18] : memref<64x384xf32, #tpu.memory_space<vmem>>, vector<8x128xf32>
    tpu.vector_store %arg9[%44, %c0_18], %43 {strides = array<i32>} : memref<64x384xf32, #tpu.memory_space<vmem>>, vector<8x128xf32>,
    %c1_i32 = arith.constant 1 : i32
    %c8_i32_19 = arith.constant 8 : i32
    %46 = arith.muli %c1_i32, %c8_i32_19 : i32
    %47 = tpu.assume_multiple %46, 8 : i32
    %48 = arith.index_cast %47 : i32 to index
    %c0_20 = arith.constant 0 : index
    %49 = vector.load %arg9[%48, %c0_20] : memref<64x384xf32, #tpu.memory_space<vmem>>, vector<8x384xf32>
    %cst_21 = arith.constant dense<0.000000e+00> : vector<8x384xf32>
    %50 = tpu.matmul %43, %8, %cst_21 {dimension_numbers = #tpu.dot_dimension_numbers<[1], [0], [0], [1], [0, 0, 1, 1], [], []>} : vector<8x128xf32>, vector<128x384xf32>, vector<8x384xf32> -> vector<8x384xf32>
    %51 = vector.extract_strided_slice %49 {offsets = [0, 0], sizes = [8, 128], strides = [1, 1]} : vector<8x384xf32> to vector<8x128xf32>
    %52 = vector.extract_strided_slice %50 {offsets = [0, 0], sizes = [8, 128], strides = [1, 1]} : vector<8x384xf32> to vector<8x128xf32>
    %53 = arith.addf %51, %52 : vector<8x128xf32>
    %54 = arith.negf %53 : vector<8x128xf32>
    %55 = math.exp %54 : vector<8x128xf32>
    %cst_22 = arith.constant 1.000000e+00 : f32
    %56 = vector.broadcast %cst_22 : f32 to vector<8x128xf32>
    %57 = arith.addf %56, %55 : vector<8x128xf32>
    %58 = arith.divf %56, %57 : vector<8x128xf32>
    %59 = vector.extract_strided_slice %49 {offsets = [0, 128], sizes = [8, 128], strides = [1, 1]} : vector<8x384xf32> to vector<8x128xf32>
    %60 = vector.extract_strided_slice %50 {offsets = [0, 128], sizes = [8, 128], strides = [1, 1]} : vector<8x384xf32> to vector<8x128xf32>
    %61 = arith.addf %59, %60 : vector<8x128xf32>
    %62 = arith.negf %61 : vector<8x128xf32>
    %63 = math.exp %62 : vector<8x128xf32>
    %cst_23 = arith.constant 1.000000e+00 : f32
    %64 = vector.broadcast %cst_23 : f32 to vector<8x128xf32>
    %65 = arith.addf %64, %63 : vector<8x128xf32>
    %66 = arith.divf %64, %65 : vector<8x128xf32>
    %67 = vector.extract_strided_slice %49 {offsets = [0, 256], sizes = [8, 128], strides = [1, 1]} : vector<8x384xf32> to vector<8x128xf32>
    %68 = vector.extract_strided_slice %50 {offsets = [0, 256], sizes = [8, 128], strides = [1, 1]} : vector<8x384xf32> to vector<8x128xf32>
    %69 = vector.broadcast %9 : vector<1x128xf32> to vector<8x128xf32>
    %70 = arith.addf %68, %69 : vector<8x128xf32>
    %71 = arith.mulf %58, %70 : vector<8x128xf32>
    %72 = arith.addf %67, %71 : vector<8x128xf32>
    %73 = math.tanh %72 : vector<8x128xf32>
    %cst_24 = arith.constant 1.000000e+00 : f32
    %74 = vector.broadcast %cst_24 : f32 to vector<8x128xf32>
    %75 = arith.subf %74, %66 : vector<8x128xf32>
    %76 = arith.mulf %75, %73 : vector<8x128xf32>
    %77 = arith.mulf %66, %43 : vector<8x128xf32>
    %78 = arith.addf %76, %77 : vector<8x128xf32>
    %79 = arith.index_cast %47 : i32 to index
    %c0_25 = arith.constant 0 : index
    %80 = vector.load %arg9[%79, %c0_25] : memref<64x384xf32, #tpu.memory_space<vmem>>, vector<8x128xf32>
    tpu.vector_store %arg9[%79, %c0_25], %78 {strides = array<i32>} : memref<64x384xf32, #tpu.memory_space<vmem>>, vector<8x128xf32>,
    %c2_i32 = arith.constant 2 : i32
    %c8_i32_26 = arith.constant 8 : i32
    %81 = arith.muli %c2_i32, %c8_i32_26 : i32
    %82 = tpu.assume_multiple %81, 8 : i32
    %83 = arith.index_cast %82 : i32 to index
    %c0_27 = arith.constant 0 : index
    %84 = vector.load %arg9[%83, %c0_27] : memref<64x384xf32, #tpu.memory_space<vmem>>, vector<8x384xf32>
    %cst_28 = arith.constant dense<0.000000e+00> : vector<8x384xf32>
    %85 = tpu.matmul %78, %8, %cst_28 {dimension_numbers = #tpu.dot_dimension_numbers<[1], [0], [0], [1], [0, 0, 1, 1], [], []>} : vector<8x128xf32>, vector<128x384xf32>, vector<8x384xf32> -> vector<8x384xf32>
    %86 = vector.extract_strided_slice %84 {offsets = [0, 0], sizes = [8, 128], strides = [1, 1]} : vector<8x384xf32> to vector<8x128xf32>
    %87 = vector.extract_strided_slice %85 {offsets = [0, 0], sizes = [8, 128], strides = [1, 1]} : vector<8x384xf32> to vector<8x128xf32>
    %88 = arith.addf %86, %87 : vector<8x128xf32>
    %89 = arith.negf %88 : vector<8x128xf32>
    %90 = math.exp %89 : vector<8x128xf32>
    %cst_29 = arith.constant 1.000000e+00 : f32
    %91 = vector.broadcast %cst_29 : f32 to vector<8x128xf32>
    %92 = arith.addf %91, %90 : vector<8x128xf32>
    %93 = arith.divf %91, %92 : vector<8x128xf32>
    %94 = vector.extract_strided_slice %84 {offsets = [0, 128], sizes = [8, 128], strides = [1, 1]} : vector<8x384xf32> to vector<8x128xf32>
    %95 = vector.extract_strided_slice %85 {offsets = [0, 128], sizes = [8, 128], strides = [1, 1]} : vector<8x384xf32> to vector<8x128xf32>
    %96 = arith.addf %94, %95 : vector<8x128xf32>
    %97 = arith.negf %96 : vector<8x128xf32>
    %98 = math.exp %97 : vector<8x128xf32>
    %cst_30 = arith.constant 1.000000e+00 : f32
    %99 = vector.broadcast %cst_30 : f32 to vector<8x128xf32>
    %100 = arith.addf %99, %98 : vector<8x128xf32>
    %101 = arith.divf %99, %100 : vector<8x128xf32>
    %102 = vector.extract_strided_slice %84 {offsets = [0, 256], sizes = [8, 128], strides = [1, 1]} : vector<8x384xf32> to vector<8x128xf32>
    %103 = vector.extract_strided_slice %85 {offsets = [0, 256], sizes = [8, 128], strides = [1, 1]} : vector<8x384xf32> to vector<8x128xf32>
    %104 = vector.broadcast %9 : vector<1x128xf32> to vector<8x128xf32>
    %105 = arith.addf %103, %104 : vector<8x128xf32>
    %106 = arith.mulf %93, %105 : vector<8x128xf32>
    %107 = arith.addf %102, %106 : vector<8x128xf32>
    %108 = math.tanh %107 : vector<8x128xf32>
    %cst_31 = arith.constant 1.000000e+00 : f32
    %109 = vector.broadcast %cst_31 : f32 to vector<8x128xf32>
    %110 = arith.subf %109, %101 : vector<8x128xf32>
    %111 = arith.mulf %110, %108 : vector<8x128xf32>
    %112 = arith.mulf %101, %78 : vector<8x128xf32>
    %113 = arith.addf %111, %112 : vector<8x128xf32>
    %114 = arith.index_cast %82 : i32 to index
    %c0_32 = arith.constant 0 : index
    %115 = vector.load %arg9[%114, %c0_32] : memref<64x384xf32, #tpu.memory_space<vmem>>, vector<8x128xf32>
    tpu.vector_store %arg9[%114, %c0_32], %113 {strides = array<i32>} : memref<64x384xf32, #tpu.memory_space<vmem>>, vector<8x128xf32>,
    %c3_i32 = arith.constant 3 : i32
    %c8_i32_33 = arith.constant 8 : i32
    %116 = arith.muli %c3_i32, %c8_i32_33 : i32
    %117 = tpu.assume_multiple %116, 8 : i32
    %118 = arith.index_cast %117 : i32 to index
    %c0_34 = arith.constant 0 : index
    %119 = vector.load %arg9[%118, %c0_34] : memref<64x384xf32, #tpu.memory_space<vmem>>, vector<8x384xf32>
    %cst_35 = arith.constant dense<0.000000e+00> : vector<8x384xf32>
    %120 = tpu.matmul %113, %8, %cst_35 {dimension_numbers = #tpu.dot_dimension_numbers<[1], [0], [0], [1], [0, 0, 1, 1], [], []>} : vector<8x128xf32>, vector<128x384xf32>, vector<8x384xf32> -> vector<8x384xf32>
    %121 = vector.extract_strided_slice %119 {offsets = [0, 0], sizes = [8, 128], strides = [1, 1]} : vector<8x384xf32> to vector<8x128xf32>
    %122 = vector.extract_strided_slice %120 {offsets = [0, 0], sizes = [8, 128], strides = [1, 1]} : vector<8x384xf32> to vector<8x128xf32>
    %123 = arith.addf %121, %122 : vector<8x128xf32>
    %124 = arith.negf %123 : vector<8x128xf32>
    %125 = math.exp %124 : vector<8x128xf32>
    %cst_36 = arith.constant 1.000000e+00 : f32
    %126 = vector.broadcast %cst_36 : f32 to vector<8x128xf32>
    %127 = arith.addf %126, %125 : vector<8x128xf32>
    %128 = arith.divf %126, %127 : vector<8x128xf32>
    %129 = vector.extract_strided_slice %119 {offsets = [0, 128], sizes = [8, 128], strides = [1, 1]} : vector<8x384xf32> to vector<8x128xf32>
    %130 = vector.extract_strided_slice %120 {offsets = [0, 128], sizes = [8, 128], strides = [1, 1]} : vector<8x384xf32> to vector<8x128xf32>
    %131 = arith.addf %129, %130 : vector<8x128xf32>
    %132 = arith.negf %131 : vector<8x128xf32>
    %133 = math.exp %132 : vector<8x128xf32>
    %cst_37 = arith.constant 1.000000e+00 : f32
    %134 = vector.broadcast %cst_37 : f32 to vector<8x128xf32>
    %135 = arith.addf %134, %133 : vector<8x128xf32>
    %136 = arith.divf %134, %135 : vector<8x128xf32>
    %137 = vector.extract_strided_slice %119 {offsets = [0, 256], sizes = [8, 128], strides = [1, 1]} : vector<8x384xf32> to vector<8x128xf32>
    %138 = vector.extract_strided_slice %120 {offsets = [0, 256], sizes = [8, 128], strides = [1, 1]} : vector<8x384xf32> to vector<8x128xf32>
    %139 = vector.broadcast %9 : vector<1x128xf32> to vector<8x128xf32>
    %140 = arith.addf %138, %139 : vector<8x128xf32>
    %141 = arith.mulf %128, %140 : vector<8x128xf32>
    %142 = arith.addf %137, %141 : vector<8x128xf32>
    %143 = math.tanh %142 : vector<8x128xf32>
    %cst_38 = arith.constant 1.000000e+00 : f32
    %144 = vector.broadcast %cst_38 : f32 to vector<8x128xf32>
    %145 = arith.subf %144, %136 : vector<8x128xf32>
    %146 = arith.mulf %145, %143 : vector<8x128xf32>
    %147 = arith.mulf %136, %113 : vector<8x128xf32>
    %148 = arith.addf %146, %147 : vector<8x128xf32>
    %149 = arith.index_cast %117 : i32 to index
    %c0_39 = arith.constant 0 : index
    %150 = vector.load %arg9[%149, %c0_39] : memref<64x384xf32, #tpu.memory_space<vmem>>, vector<8x128xf32>
    tpu.vector_store %arg9[%149, %c0_39], %148 {strides = array<i32>} : memref<64x384xf32, #tpu.memory_space<vmem>>, vector<8x128xf32>,
    %c4_i32 = arith.constant 4 : i32
    %c8_i32_40 = arith.constant 8 : i32
    %151 = arith.muli %c4_i32, %c8_i32_40 : i32
    %152 = tpu.assume_multiple %151, 8 : i32
    %153 = arith.index_cast %152 : i32 to index
    %c0_41 = arith.constant 0 : index
    %154 = vector.load %arg9[%153, %c0_41] : memref<64x384xf32, #tpu.memory_space<vmem>>, vector<8x384xf32>
    %cst_42 = arith.constant dense<0.000000e+00> : vector<8x384xf32>
    %155 = tpu.matmul %148, %8, %cst_42 {dimension_numbers = #tpu.dot_dimension_numbers<[1], [0], [0], [1], [0, 0, 1, 1], [], []>} : vector<8x128xf32>, vector<128x384xf32>, vector<8x384xf32> -> vector<8x384xf32>
    %156 = vector.extract_strided_slice %154 {offsets = [0, 0], sizes = [8, 128], strides = [1, 1]} : vector<8x384xf32> to vector<8x128xf32>
    %157 = vector.extract_strided_slice %155 {offsets = [0, 0], sizes = [8, 128], strides = [1, 1]} : vector<8x384xf32> to vector<8x128xf32>
    %158 = arith.addf %156, %157 : vector<8x128xf32>
    %159 = arith.negf %158 : vector<8x128xf32>
    %160 = math.exp %159 : vector<8x128xf32>
    %cst_43 = arith.constant 1.000000e+00 : f32
    %161 = vector.broadcast %cst_43 : f32 to vector<8x128xf32>
    %162 = arith.addf %161, %160 : vector<8x128xf32>
    %163 = arith.divf %161, %162 : vector<8x128xf32>
    %164 = vector.extract_strided_slice %154 {offsets = [0, 128], sizes = [8, 128], strides = [1, 1]} : vector<8x384xf32> to vector<8x128xf32>
    %165 = vector.extract_strided_slice %155 {offsets = [0, 128], sizes = [8, 128], strides = [1, 1]} : vector<8x384xf32> to vector<8x128xf32>
    %166 = arith.addf %164, %165 : vector<8x128xf32>
    %167 = arith.negf %166 : vector<8x128xf32>
    %168 = math.exp %167 : vector<8x128xf32>
    %cst_44 = arith.constant 1.000000e+00 : f32
    %169 = vector.broadcast %cst_44 : f32 to vector<8x128xf32>
    %170 = arith.addf %169, %168 : vector<8x128xf32>
    %171 = arith.divf %169, %170 : vector<8x128xf32>
    %172 = vector.extract_strided_slice %154 {offsets = [0, 256], sizes = [8, 128], strides = [1, 1]} : vector<8x384xf32> to vector<8x128xf32>
    %173 = vector.extract_strided_slice %155 {offsets = [0, 256], sizes = [8, 128], strides = [1, 1]} : vector<8x384xf32> to vector<8x128xf32>
    %174 = vector.broadcast %9 : vector<1x128xf32> to vector<8x128xf32>
    %175 = arith.addf %173, %174 : vector<8x128xf32>
    %176 = arith.mulf %163, %175 : vector<8x128xf32>
    %177 = arith.addf %172, %176 : vector<8x128xf32>
    %178 = math.tanh %177 : vector<8x128xf32>
    %cst_45 = arith.constant 1.000000e+00 : f32
    %179 = vector.broadcast %cst_45 : f32 to vector<8x128xf32>
    %180 = arith.subf %179, %171 : vector<8x128xf32>
    %181 = arith.mulf %180, %178 : vector<8x128xf32>
    %182 = arith.mulf %171, %148 : vector<8x128xf32>
    %183 = arith.addf %181, %182 : vector<8x128xf32>
    %184 = arith.index_cast %152 : i32 to index
    %c0_46 = arith.constant 0 : index
    %185 = vector.load %arg9[%184, %c0_46] : memref<64x384xf32, #tpu.memory_space<vmem>>, vector<8x128xf32>
    tpu.vector_store %arg9[%184, %c0_46], %183 {strides = array<i32>} : memref<64x384xf32, #tpu.memory_space<vmem>>, vector<8x128xf32>,
    %c5_i32 = arith.constant 5 : i32
    %c8_i32_47 = arith.constant 8 : i32
    %186 = arith.muli %c5_i32, %c8_i32_47 : i32
    %187 = tpu.assume_multiple %186, 8 : i32
    %188 = arith.index_cast %187 : i32 to index
    %c0_48 = arith.constant 0 : index
    %189 = vector.load %arg9[%188, %c0_48] : memref<64x384xf32, #tpu.memory_space<vmem>>, vector<8x384xf32>
    %cst_49 = arith.constant dense<0.000000e+00> : vector<8x384xf32>
    %190 = tpu.matmul %183, %8, %cst_49 {dimension_numbers = #tpu.dot_dimension_numbers<[1], [0], [0], [1], [0, 0, 1, 1], [], []>} : vector<8x128xf32>, vector<128x384xf32>, vector<8x384xf32> -> vector<8x384xf32>
    %191 = vector.extract_strided_slice %189 {offsets = [0, 0], sizes = [8, 128], strides = [1, 1]} : vector<8x384xf32> to vector<8x128xf32>
    %192 = vector.extract_strided_slice %190 {offsets = [0, 0], sizes = [8, 128], strides = [1, 1]} : vector<8x384xf32> to vector<8x128xf32>
    %193 = arith.addf %191, %192 : vector<8x128xf32>
    %194 = arith.negf %193 : vector<8x128xf32>
    %195 = math.exp %194 : vector<8x128xf32>
    %cst_50 = arith.constant 1.000000e+00 : f32
    %196 = vector.broadcast %cst_50 : f32 to vector<8x128xf32>
    %197 = arith.addf %196, %195 : vector<8x128xf32>
    %198 = arith.divf %196, %197 : vector<8x128xf32>
    %199 = vector.extract_strided_slice %189 {offsets = [0, 128], sizes = [8, 128], strides = [1, 1]} : vector<8x384xf32> to vector<8x128xf32>
    %200 = vector.extract_strided_slice %190 {offsets = [0, 128], sizes = [8, 128], strides = [1, 1]} : vector<8x384xf32> to vector<8x128xf32>
    %201 = arith.addf %199, %200 : vector<8x128xf32>
    %202 = arith.negf %201 : vector<8x128xf32>
    %203 = math.exp %202 : vector<8x128xf32>
    %cst_51 = arith.constant 1.000000e+00 : f32
    %204 = vector.broadcast %cst_51 : f32 to vector<8x128xf32>
    %205 = arith.addf %204, %203 : vector<8x128xf32>
    %206 = arith.divf %204, %205 : vector<8x128xf32>
    %207 = vector.extract_strided_slice %189 {offsets = [0, 256], sizes = [8, 128], strides = [1, 1]} : vector<8x384xf32> to vector<8x128xf32>
    %208 = vector.extract_strided_slice %190 {offsets = [0, 256], sizes = [8, 128], strides = [1, 1]} : vector<8x384xf32> to vector<8x128xf32>
    %209 = vector.broadcast %9 : vector<1x128xf32> to vector<8x128xf32>
    %210 = arith.addf %208, %209 : vector<8x128xf32>
    %211 = arith.mulf %198, %210 : vector<8x128xf32>
    %212 = arith.addf %207, %211 : vector<8x128xf32>
    %213 = math.tanh %212 : vector<8x128xf32>
    %cst_52 = arith.constant 1.000000e+00 : f32
    %214 = vector.broadcast %cst_52 : f32 to vector<8x128xf32>
    %215 = arith.subf %214, %206 : vector<8x128xf32>
    %216 = arith.mulf %215, %213 : vector<8x128xf32>
    %217 = arith.mulf %206, %183 : vector<8x128xf32>
    %218 = arith.addf %216, %217 : vector<8x128xf32>
    %219 = arith.index_cast %187 : i32 to index
    %c0_53 = arith.constant 0 : index
    %220 = vector.load %arg9[%219, %c0_53] : memref<64x384xf32, #tpu.memory_space<vmem>>, vector<8x128xf32>
    tpu.vector_store %arg9[%219, %c0_53], %218 {strides = array<i32>} : memref<64x384xf32, #tpu.memory_space<vmem>>, vector<8x128xf32>,
    %c6_i32 = arith.constant 6 : i32
    %c8_i32_54 = arith.constant 8 : i32
    %221 = arith.muli %c6_i32, %c8_i32_54 : i32
    %222 = tpu.assume_multiple %221, 8 : i32
    %223 = arith.index_cast %222 : i32 to index
    %c0_55 = arith.constant 0 : index
    %224 = vector.load %arg9[%223, %c0_55] : memref<64x384xf32, #tpu.memory_space<vmem>>, vector<8x384xf32>
    %cst_56 = arith.constant dense<0.000000e+00> : vector<8x384xf32>
    %225 = tpu.matmul %218, %8, %cst_56 {dimension_numbers = #tpu.dot_dimension_numbers<[1], [0], [0], [1], [0, 0, 1, 1], [], []>} : vector<8x128xf32>, vector<128x384xf32>, vector<8x384xf32> -> vector<8x384xf32>
    %226 = vector.extract_strided_slice %224 {offsets = [0, 0], sizes = [8, 128], strides = [1, 1]} : vector<8x384xf32> to vector<8x128xf32>
    %227 = vector.extract_strided_slice %225 {offsets = [0, 0], sizes = [8, 128], strides = [1, 1]} : vector<8x384xf32> to vector<8x128xf32>
    %228 = arith.addf %226, %227 : vector<8x128xf32>
    %229 = arith.negf %228 : vector<8x128xf32>
    %230 = math.exp %229 : vector<8x128xf32>
    %cst_57 = arith.constant 1.000000e+00 : f32
    %231 = vector.broadcast %cst_57 : f32 to vector<8x128xf32>
    %232 = arith.addf %231, %230 : vector<8x128xf32>
    %233 = arith.divf %231, %232 : vector<8x128xf32>
    %234 = vector.extract_strided_slice %224 {offsets = [0, 128], sizes = [8, 128], strides = [1, 1]} : vector<8x384xf32> to vector<8x128xf32>
    %235 = vector.extract_strided_slice %225 {offsets = [0, 128], sizes = [8, 128], strides = [1, 1]} : vector<8x384xf32> to vector<8x128xf32>
    %236 = arith.addf %234, %235 : vector<8x128xf32>
    %237 = arith.negf %236 : vector<8x128xf32>
    %238 = math.exp %237 : vector<8x128xf32>
    %cst_58 = arith.constant 1.000000e+00 : f32
    %239 = vector.broadcast %cst_58 : f32 to vector<8x128xf32>
    %240 = arith.addf %239, %238 : vector<8x128xf32>
    %241 = arith.divf %239, %240 : vector<8x128xf32>
    %242 = vector.extract_strided_slice %224 {offsets = [0, 256], sizes = [8, 128], strides = [1, 1]} : vector<8x384xf32> to vector<8x128xf32>
    %243 = vector.extract_strided_slice %225 {offsets = [0, 256], sizes = [8, 128], strides = [1, 1]} : vector<8x384xf32> to vector<8x128xf32>
    %244 = vector.broadcast %9 : vector<1x128xf32> to vector<8x128xf32>
    %245 = arith.addf %243, %244 : vector<8x128xf32>
    %246 = arith.mulf %233, %245 : vector<8x128xf32>
    %247 = arith.addf %242, %246 : vector<8x128xf32>
    %248 = math.tanh %247 : vector<8x128xf32>
    %cst_59 = arith.constant 1.000000e+00 : f32
    %249 = vector.broadcast %cst_59 : f32 to vector<8x128xf32>
    %250 = arith.subf %249, %241 : vector<8x128xf32>
    %251 = arith.mulf %250, %248 : vector<8x128xf32>
    %252 = arith.mulf %241, %218 : vector<8x128xf32>
    %253 = arith.addf %251, %252 : vector<8x128xf32>
    %254 = arith.index_cast %222 : i32 to index
    %c0_60 = arith.constant 0 : index
    %255 = vector.load %arg9[%254, %c0_60] : memref<64x384xf32, #tpu.memory_space<vmem>>, vector<8x128xf32>
    tpu.vector_store %arg9[%254, %c0_60], %253 {strides = array<i32>} : memref<64x384xf32, #tpu.memory_space<vmem>>, vector<8x128xf32>,
    %c7_i32 = arith.constant 7 : i32
    %c8_i32_61 = arith.constant 8 : i32
    %256 = arith.muli %c7_i32, %c8_i32_61 : i32
    %257 = tpu.assume_multiple %256, 8 : i32
    %258 = arith.index_cast %257 : i32 to index
    %c0_62 = arith.constant 0 : index
    %259 = vector.load %arg9[%258, %c0_62] : memref<64x384xf32, #tpu.memory_space<vmem>>, vector<8x384xf32>
    %cst_63 = arith.constant dense<0.000000e+00> : vector<8x384xf32>
    %260 = tpu.matmul %253, %8, %cst_63 {dimension_numbers = #tpu.dot_dimension_numbers<[1], [0], [0], [1], [0, 0, 1, 1], [], []>} : vector<8x128xf32>, vector<128x384xf32>, vector<8x384xf32> -> vector<8x384xf32>
    %261 = vector.extract_strided_slice %259 {offsets = [0, 0], sizes = [8, 128], strides = [1, 1]} : vector<8x384xf32> to vector<8x128xf32>
    %262 = vector.extract_strided_slice %260 {offsets = [0, 0], sizes = [8, 128], strides = [1, 1]} : vector<8x384xf32> to vector<8x128xf32>
    %263 = arith.addf %261, %262 : vector<8x128xf32>
    %264 = arith.negf %263 : vector<8x128xf32>
    %265 = math.exp %264 : vector<8x128xf32>
    %cst_64 = arith.constant 1.000000e+00 : f32
    %266 = vector.broadcast %cst_64 : f32 to vector<8x128xf32>
    %267 = arith.addf %266, %265 : vector<8x128xf32>
    %268 = arith.divf %266, %267 : vector<8x128xf32>
    %269 = vector.extract_strided_slice %259 {offsets = [0, 128], sizes = [8, 128], strides = [1, 1]} : vector<8x384xf32> to vector<8x128xf32>
    %270 = vector.extract_strided_slice %260 {offsets = [0, 128], sizes = [8, 128], strides = [1, 1]} : vector<8x384xf32> to vector<8x128xf32>
    %271 = arith.addf %269, %270 : vector<8x128xf32>
    %272 = arith.negf %271 : vector<8x128xf32>
    %273 = math.exp %272 : vector<8x128xf32>
    %cst_65 = arith.constant 1.000000e+00 : f32
    %274 = vector.broadcast %cst_65 : f32 to vector<8x128xf32>
    %275 = arith.addf %274, %273 : vector<8x128xf32>
    %276 = arith.divf %274, %275 : vector<8x128xf32>
    %277 = vector.extract_strided_slice %259 {offsets = [0, 256], sizes = [8, 128], strides = [1, 1]} : vector<8x384xf32> to vector<8x128xf32>
    %278 = vector.extract_strided_slice %260 {offsets = [0, 256], sizes = [8, 128], strides = [1, 1]} : vector<8x384xf32> to vector<8x128xf32>
    %279 = vector.broadcast %9 : vector<1x128xf32> to vector<8x128xf32>
    %280 = arith.addf %278, %279 : vector<8x128xf32>
    %281 = arith.mulf %268, %280 : vector<8x128xf32>
    %282 = arith.addf %277, %281 : vector<8x128xf32>
    %283 = math.tanh %282 : vector<8x128xf32>
    %cst_66 = arith.constant 1.000000e+00 : f32
    %284 = vector.broadcast %cst_66 : f32 to vector<8x128xf32>
    %285 = arith.subf %284, %276 : vector<8x128xf32>
    %286 = arith.mulf %285, %283 : vector<8x128xf32>
    %287 = arith.mulf %276, %253 : vector<8x128xf32>
    %288 = arith.addf %286, %287 : vector<8x128xf32>
    %289 = arith.index_cast %257 : i32 to index
    %c0_67 = arith.constant 0 : index
    %290 = vector.load %arg9[%289, %c0_67] : memref<64x384xf32, #tpu.memory_space<vmem>>, vector<8x128xf32>
    tpu.vector_store %arg9[%289, %c0_67], %288 {strides = array<i32>} : memref<64x384xf32, #tpu.memory_space<vmem>>, vector<8x128xf32>,
    %c8_i32_68 = arith.constant 8 : i32
    %c0_69 = arith.constant 0 : index
    %c0_70 = arith.constant 0 : index
    %291 = vector.load %arg9[%c0_69, %c0_70] : memref<64x384xf32, #tpu.memory_space<vmem>>, vector<64x128xf32>
    %c0_71 = arith.constant 0 : index
    %c0_72 = arith.constant 0 : index
    %292 = vector.load %arg6[%c0_71, %c0_72] : memref<128x128xf32, #tpu.memory_space<vmem>>, vector<128x128xf32>
    %cst_73 = arith.constant dense<0.000000e+00> : vector<64x128xf32>
    %293 = tpu.matmul %291, %292, %cst_73 {dimension_numbers = #tpu.dot_dimension_numbers<[1], [0], [0], [1], [0, 0, 1, 1], [], []>} : vector<64x128xf32>, vector<128x128xf32>, vector<64x128xf32> -> vector<64x128xf32>
    %c0_74 = arith.constant 0 : index
    %c0_75 = arith.constant 0 : index
    %294 = vector.load %arg7[%c0_74, %c0_75] : memref<1x128xf32, #tpu.memory_space<vmem>>, vector<1x128xf32>
    %295 = vector.broadcast %294 : vector<1x128xf32> to vector<64x128xf32>
    %296 = arith.addf %293, %295 : vector<64x128xf32>
    %297 = arith.negf %296 : vector<64x128xf32>
    %298 = math.exp %297 : vector<64x128xf32>
    %cst_76 = arith.constant 1.000000e+00 : f32
    %299 = vector.broadcast %cst_76 : f32 to vector<64x128xf32>
    %300 = arith.addf %299, %298 : vector<64x128xf32>
    %301 = arith.divf %299, %300 : vector<64x128xf32>
    %302 = vector.shape_cast %301 : vector<64x128xf32> to vector<8x8x128xf32>
    %c0_77 = arith.constant 0 : index
    %c0_78 = arith.constant 0 : index
    %c0_79 = arith.constant 0 : index
    %303 = vector.load %arg8[%c0_77, %c0_78, %c0_79] : memref<8x8x128xf32, #tpu.memory_space<vmem>>, vector<8x8x128xf32>
    tpu.vector_store %arg8[%c0_77, %c0_78, %c0_79], %302 {strides = array<i32>} : memref<8x8x128xf32, #tpu.memory_space<vmem>>, vector<8x8x128xf32>,
    return
  }
  func.func @transform_0(%arg0: i32) -> (i32, i32, i32) {
    %c0_i32 = arith.constant 0 : i32
    %c0_i32_0 = arith.constant 0 : i32
    %c0_i32_1 = arith.constant 0 : i32
    return %c0_i32, %arg0, %c0_i32_0 : i32, i32, i32
  }
  func.func @transform_1(%arg0: i32) -> (i32, i32) {
    %c0_i32 = arith.constant 0 : i32
    %c0_i32_0 = arith.constant 0 : i32
    %c0_i32_1 = arith.constant 0 : i32
    return %c0_i32, %c0_i32_0 : i32, i32
  }
  func.func @transform_2(%arg0: i32) -> (i32, i32) {
    %c0_i32 = arith.constant 0 : i32
    %c0_i32_0 = arith.constant 0 : i32
    %c0_i32_1 = arith.constant 0 : i32
    return %c0_i32, %c0_i32_0 : i32, i32
  }
  func.func @transform_3(%arg0: i32) -> (i32, i32) {
    %c0_i32 = arith.constant 0 : i32
    %c0_i32_0 = arith.constant 0 : i32
    %c0_i32_1 = arith.constant 0 : i32
    return %c0_i32, %c0_i32_0 : i32, i32
  }
  func.func @transform_4(%arg0: i32) -> (i32, i32) {
    %c0_i32 = arith.constant 0 : i32
    %c0_i32_0 = arith.constant 0 : i32
    %c0_i32_1 = arith.constant 0 : i32
    return %c0_i32, %c0_i32_0 : i32, i32
  }
  func.func @transform_5(%arg0: i32) -> (i32, i32) {
    %c0_i32 = arith.constant 0 : i32
    %c0_i32_0 = arith.constant 0 : i32
    %c0_i32_1 = arith.constant 0 : i32
    return %c0_i32, %c0_i32_0 : i32, i32
  }
  func.func @transform_6(%arg0: i32) -> (i32, i32) {
    %c0_i32 = arith.constant 0 : i32
    %c0_i32_0 = arith.constant 0 : i32
    %c0_i32_1 = arith.constant 0 : i32
    return %c0_i32, %c0_i32_0 : i32, i32
  }
  func.func @transform_7(%arg0: i32) -> (i32, i32, i32) {
    %c0_i32 = arith.constant 0 : i32
    %c0_i32_0 = arith.constant 0 : i32
    %c0_i32_1 = arith.constant 0 : i32
    return %c0_i32, %arg0, %c0_i32_0 : i32, i32, i32
  }
}

</mosaic_0001>

<llo_original>
// kernel: discriminator_forward.1
$region0: #{discriminator_forward.1}
  #allocation0 [shape = 'u32[]', space=smem, size = 0x4, offset = 0x4, fixed_abs, tag = 'smem constant byte address 0x4 - core index']
  #allocation1 [shape = 'u32[72,128]{1,0:T(1,128)}', space=vmem, size = 0x9000, scoped, tag = 'internal scratch']
  #allocation2 [shape = 'f32[64,384]{1,0:T(8,128)}', space=vmem, size = 0x18000, scoped, tag = 'scratch operand']
  %s0 = inlined_call_operand.vmem [shape: f32[8,8,4], index: 0, kind: input, shape index: {}]
  %s1 = inlined_call_operand.vmem [shape: f32[4,384], index: 1, kind: input, shape index: {}]
  %s2 = inlined_call_operand.vmem [shape: f32[128,384], index: 2, kind: input, shape index: {}]
  %s3 = inlined_call_operand.vmem [shape: f32[1,384], index: 3, kind: input, shape index: {}]
  %s4 = inlined_call_operand.vmem [shape: f32[1,128], index: 4, kind: input, shape index: {}]
  %s5 = inlined_call_operand.vmem [shape: f32[128,128], index: 5, kind: input, shape index: {}]
  %s6 = inlined_call_operand.vmem [shape: f32[1,128], index: 6, kind: input, shape index: {}]
  %s7 = inlined_call_operand.vmem [shape: f32[8,8,128], index: 7, kind: output, shape index: {}]
  %s8 = sld [smem:[#allocation0]]
  $region38: #{discriminator_forward.1} parent=0
    _
  %s10 = ssub.s32 1, %s8
  %s11 = scalar_select 0, %s10, %s8
  // Predicated region
  $region2: #{discriminator_forward.1} parent=0 // pred_check
    _
  $region3: #{discriminator_forward.1} parent=0 // pred_check_branch
    %13 = sbr.rel (0) target = $region5
  $region4: #{discriminator_forward.1} parent=0 // pred_region
    _
  $region5: #{discriminator_forward.1} parent=0 // pred_fallthru
    _
  // Predicated region
  $region6: #{discriminator_forward.1} parent=0 // pred_check
    _
  $region7: #{discriminator_forward.1} parent=0 // pred_check_branch
    %15 = sbr.rel (0) target = $region9
  $region8: #{discriminator_forward.1} parent=0 // pred_region
    _
  $region9: #{discriminator_forward.1} parent=0 // pred_fallthru
    _
  // Predicated region
  $region10: #{discriminator_forward.1} parent=0 // pred_check
    _
  $region11: #{discriminator_forward.1} parent=0 // pred_check_branch
    %17 = sbr.rel (0) target = $region13
  $region12: #{discriminator_forward.1} parent=0 // pred_region
    _
  $region13: #{discriminator_forward.1} parent=0 // pred_fallthru
    _
  // Predicated region
  $region14: #{discriminator_forward.1} parent=0 // pred_check
    _
  $region15: #{discriminator_forward.1} parent=0 // pred_check_branch
    %19 = sbr.rel (0) target = $region17
  $region16: #{discriminator_forward.1} parent=0 // pred_region
    _
  $region17: #{discriminator_forward.1} parent=0 // pred_fallthru
    _
  // Predicated region
  $region18: #{discriminator_forward.1} parent=0 // pred_check
    _
  $region19: #{discriminator_forward.1} parent=0 // pred_check_branch
    %21 = sbr.rel (0) target = $region21
  $region20: #{discriminator_forward.1} parent=0 // pred_region
    _
  $region21: #{discriminator_forward.1} parent=0 // pred_fallthru
    _
  // Predicated region
  $region22: #{discriminator_forward.1} parent=0 // pred_check
    _
  $region23: #{discriminator_forward.1} parent=0 // pred_check_branch
    %23 = sbr.rel (0) target = $region25
  $region24: #{discriminator_forward.1} parent=0 // pred_region
    _
  $region25: #{discriminator_forward.1} parent=0 // pred_fallthru
    _
  // Predicated region
  $region26: #{discriminator_forward.1} parent=0 // pred_check
    _
  $region27: #{discriminator_forward.1} parent=0 // pred_check_branch
    %25 = sbr.rel (0) target = $region29
  $region28: #{discriminator_forward.1} parent=0 // pred_region
    _
  $region29: #{discriminator_forward.1} parent=0 // pred_fallthru
    _
  %v26 = vld [vmem:[%s0] sm:$0xff]
  %v27 = vld [vmem:[%s0 + $0x8] sm:$0xff]
  %v28 = vld [vmem:[%s0 + $0x10] sm:$0xff]
  %v29 = vld [vmem:[%s0 + $0x18] sm:$0xff]
  %v30 = vld [vmem:[%s0 + $0x20] sm:$0xff]
  %v31 = vld [vmem:[%s0 + $0x28] sm:$0xff]
  %v32 = vld [vmem:[%s0 + $0x30] sm:$0xff]
  %v33 = vld [vmem:[%s0 + $0x38] sm:$0xff]
  %v34 = vld [vmem:[%s1] sm:$0xff]
  %v35 = vld [vmem:[%s1 + $0x8] sm:$0xf]
  %v36 = vld [vmem:[%s3] sm:$0x7]
  %v38 = vperm.slane %v36, 0
  %v39 = vperm.slane %v36, 1
  %v40 = vperm.slane %v36, 2
  %46 = vst [vmem:[#allocation1] ss:$2 sm:$0xff] %v34
  %s47 = scalar_lea.vmem [#allocation1], 16
  %48 = vst [vmem:[%s47] ss:$2 sm:$0xff] %v35
  %v49 = vld.sshfl [vmem:[#allocation1] sm:$0xff pattern:$0x75316420]
  %v50 = vld.sshfl [vmem:[#allocation1 + $0x8] sm:$0xff pattern:$0x75316420]
  %v51 = vld.sshfl [vmem:[#allocation1 + $0x10] sm:$0xff pattern:$0x75316420]
  %vm52 = vcmask 31744
  %v54 = vsel %vm52, %v26, 0
  %v57 = vsel %vm52, %v27, 0
  %v60 = vsel %vm52, %v28, 0
  %v63 = vsel %vm52, %v29, 0
  %v66 = vsel %vm52, %v30, 0
  %v69 = vsel %vm52, %v31, 0
  %v72 = vsel %vm52, %v32, 0
  %v75 = vsel %vm52, %v33, 0
  %vm77 = vcmask 1043456
  %v78 = vsel %vm77, %v49, 0
  %v80 = vsel %vm77, %v50, 0
  %v82 = vsel %vm77, %v51, 0
  %84 = vmatpush.msra.mxu0 0.0
  %85 = vmatpush.msra.mxu0 0.0
  %86 = vmatpush.msra.mxu0 0.0
  %87 = vmatpush.msra.mxu0 0.0
  %88 = vmatpush.msra.mxu0 0.0
  %89 = vmatpush.msra.mxu0 0.0
  %90 = vmatpush.msra.mxu0 0.0
  %91 = vmatpush.msra.mxu0 0.0
  %92 = vmatpush.msra.mxu0 0.0
  %93 = vmatpush.msra.mxu0 0.0
  %94 = vmatpush.msra.mxu0 0.0
  %95 = vmatpush.msra.mxu0 0.0
  %96 = vmatpush.msra.mxu0 0.0
  %97 = vmatpush.msra.mxu0 0.0
  %98 = vmatpush.msra.mxu0 0.0
  %99 = vmatpush.msra.mxu0 %v78
  %100 = vmatmul.f32.gmra.mxu0 %v54
  %v101 = vpop.f32.mrf.mxu0
  %v102 = vadd.f32 %v38, %v101
  %103 = vmatmul.f32.gmra.mxu0 %v57
  %v104 = vpop.f32.mrf.mxu0
  %v105 = vadd.f32 %v38, %v104
  %106 = vmatmul.f32.gmra.mxu0 %v60
  %v107 = vpop.f32.mrf.mxu0
  %v108 = vadd.f32 %v38, %v107
  %109 = vmatmul.f32.gmra.mxu0 %v63
  %v110 = vpop.f32.mrf.mxu0
  %v111 = vadd.f32 %v38, %v110
  %112 = vmatmul.f32.gmra.mxu0 %v66
  %v113 = vpop.f32.mrf.mxu0
  %v114 = vadd.f32 %v38, %v113
  %115 = vmatmul.f32.gmra.mxu0 %v69
  %v116 = vpop.f32.mrf.mxu0
  %v117 = vadd.f32 %v38, %v116
  %118 = vmatmul.f32.gmra.mxu0 %v72
  %v119 = vpop.f32.mrf.mxu0
  %v120 = vadd.f32 %v38, %v119
  %121 = vmatmul.f32.gmra.mxu0 %v75
  %v122 = vpop.f32.mrf.mxu0
  %v123 = vadd.f32 %v38, %v122
  %124 = vdwg.mxu0
  %125 = vmatpush.msra.mxu0 0.0
  %126 = vmatpush.msra.mxu0 0.0
  %127 = vmatpush.msra.mxu0 0.0
  %128 = vmatpush.msra.mxu0 0.0
  %129 = vmatpush.msra.mxu0 0.0
  %130 = vmatpush.msra.mxu0 0.0
  %131 = vmatpush.msra.mxu0 0.0
  %132 = vmatpush.msra.mxu0 0.0
  %133 = vmatpush.msra.mxu0 0.0
  %134 = vmatpush.msra.mxu0 0.0
  %135 = vmatpush.msra.mxu0 0.0
  %136 = vmatpush.msra.mxu0 0.0
  %137 = vmatpush.msra.mxu0 0.0
  %138 = vmatpush.msra.mxu0 0.0
  %139 = vmatpush.msra.mxu0 0.0
  %140 = vmatpush.msra.mxu0 %v80
  %141 = vmatmul.f32.gmra.mxu0 %v54
  %v142 = vpop.f32.mrf.mxu0
  %v143 = vadd.f32 %v39, %v142
  %144 = vmatmul.f32.gmra.mxu0 %v57
  %v145 = vpop.f32.mrf.mxu0
  %v146 = vadd.f32 %v39, %v145
  %147 = vmatmul.f32.gmra.mxu0 %v60
  %v148 = vpop.f32.mrf.mxu0
  %v149 = vadd.f32 %v39, %v148
  %150 = vmatmul.f32.gmra.mxu0 %v63
  %v151 = vpop.f32.mrf.mxu0
  %v152 = vadd.f32 %v39, %v151
  %153 = vmatmul.f32.gmra.mxu0 %v66
  %v154 = vpop.f32.mrf.mxu0
  %v155 = vadd.f32 %v39, %v154
  %156 = vmatmul.f32.gmra.mxu0 %v69
  %v157 = vpop.f32.mrf.mxu0
  %v158 = vadd.f32 %v39, %v157
  %159 = vmatmul.f32.gmra.mxu0 %v72
  %v160 = vpop.f32.mrf.mxu0
  %v161 = vadd.f32 %v39, %v160
  %162 = vmatmul.f32.gmra.mxu0 %v75
  %v163 = vpop.f32.mrf.mxu0
  %v164 = vadd.f32 %v39, %v163
  %165 = vdwg.mxu0
  %166 = vmatpush.msra.mxu0 0.0
  %167 = vmatpush.msra.mxu0 0.0
  %168 = vmatpush.msra.mxu0 0.0
  %169 = vmatpush.msra.mxu0 0.0
  %170 = vmatpush.msra.mxu0 0.0
  %171 = vmatpush.msra.mxu0 0.0
  %172 = vmatpush.msra.mxu0 0.0
  %173 = vmatpush.msra.mxu0 0.0
  %174 = vmatpush.msra.mxu0 0.0
  %175 = vmatpush.msra.mxu0 0.0
  %176 = vmatpush.msra.mxu0 0.0
  %177 = vmatpush.msra.mxu0 0.0
  %178 = vmatpush.msra.mxu0 0.0
  %179 = vmatpush.msra.mxu0 0.0
  %180 = vmatpush.msra.mxu0 0.0
  %181 = vmatpush.msra.mxu0 %v82
  %182 = vmatmul.f32.gmra.mxu0 %v54
  %v183 = vpop.f32.mrf.mxu0
  %v184 = vadd.f32 %v40, %v183
  %185 = vmatmul.f32.gmra.mxu0 %v57
  %v186 = vpop.f32.mrf.mxu0
  %v187 = vadd.f32 %v40, %v186
  %188 = vmatmul.f32.gmra.mxu0 %v60
  %v189 = vpop.f32.mrf.mxu0
  %v190 = vadd.f32 %v40, %v189
  %191 = vmatmul.f32.gmra.mxu0 %v63
  %v192 = vpop.f32.mrf.mxu0
  %v193 = vadd.f32 %v40, %v192
  %194 = vmatmul.f32.gmra.mxu0 %v66
  %v195 = vpop.f32.mrf.mxu0
  %v196 = vadd.f32 %v40, %v195
  %197 = vmatmul.f32.gmra.mxu0 %v69
  %v198 = vpop.f32.mrf.mxu0
  %v199 = vadd.f32 %v40, %v198
  %200 = vmatmul.f32.gmra.mxu0 %v72
  %v201 = vpop.f32.mrf.mxu0
  %v202 = vadd.f32 %v40, %v201
  %203 = vmatmul.f32.gmra.mxu0 %v75
  %v204 = vpop.f32.mrf.mxu0
  %v205 = vadd.f32 %v40, %v204
  %206 = vdwg.mxu0
  %207 = vst [vmem:[#allocation2] sm:$0xff] %v102
  %208 = vst [vmem:[#allocation2 + $0x8] sm:$0xff] %v143
  %209 = vst [vmem:[#allocation2 + $0x10] sm:$0xff] %v184
  %210 = vst [vmem:[#allocation2 + $0x18] sm:$0xff] %v105
  %211 = vst [vmem:[#allocation2 + $0x20] sm:$0xff] %v146
  %212 = vst [vmem:[#allocation2 + $0x28] sm:$0xff] %v187
  %213 = vst [vmem:[#allocation2 + $0x30] sm:$0xff] %v108
  %214 = vst [vmem:[#allocation2 + $0x38] sm:$0xff] %v149
  %215 = vst [vmem:[#allocation2 + $0x40] sm:$0xff] %v190
  %216 = vst [vmem:[#allocation2 + $0x48] sm:$0xff] %v111
  %217 = vst [vmem:[#allocation2 + $0x50] sm:$0xff] %v152
  %218 = vst [vmem:[#allocation2 + $0x58] sm:$0xff] %v193
  %219 = vst [vmem:[#allocation2 + $0x60] sm:$0xff] %v114
  %220 = vst [vmem:[#allocation2 + $0x68] sm:$0xff] %v155
  %221 = vst [vmem:[#allocation2 + $0x70] sm:$0xff] %v196
  %222 = vst [vmem:[#allocation2 + $0x78] sm:$0xff] %v117
  %223 = vst [vmem:[#allocation2 + $0x80] sm:$0xff] %v158
  %224 = vst [vmem:[#allocation2 + $0x88] sm:$0xff] %v199
  %225 = vst [vmem:[#allocation2 + $0x90] sm:$0xff] %v120
  %226 = vst [vmem:[#allocation2 + $0x98] sm:$0xff] %v161
  %227 = vst [vmem:[#allocation2 + $0xa0] sm:$0xff] %v202
  %228 = vst [vmem:[#allocation2 + $0xa8] sm:$0xff] %v123
  %229 = vst [vmem:[#allocation2 + $0xb0] sm:$0xff] %v164
  %230 = vst [vmem:[#allocation2 + $0xb8] sm:$0xff] %v205
  %v231 = vld [vmem:[%s2] sm:$0xff]
  %v232 = vld [vmem:[%s2 + $0x8] sm:$0xff]
  %v233 = vld [vmem:[%s2 + $0x10] sm:$0xff]
  %v234 = vld [vmem:[%s2 + $0x18] sm:$0xff]
  %v235 = vld [vmem:[%s2 + $0x20] sm:$0xff]
  %v236 = vld [vmem:[%s2 + $0x28] sm:$0xff]
  %v237 = vld [vmem:[%s2 + $0x30] sm:$0xff]
  %v238 = vld [vmem:[%s2 + $0x38] sm:$0xff]
  %v239 = vld [vmem:[%s2 + $0x40] sm:$0xff]
  %v240 = vld [vmem:[%s2 + $0x48] sm:$0xff]
  %v241 = vld [vmem:[%s2 + $0x50] sm:$0xff]
  %v242 = vld [vmem:[%s2 + $0x58] sm:$0xff]
  %v243 = vld [vmem:[%s2 + $0x60] sm:$0xff]
  %v244 = vld [vmem:[%s2 + $0x68] sm:$0xff]
  %v245 = vld [vmem:[%s2 + $0x70] sm:$0xff]
  %v246 = vld [vmem:[%s2 + $0x78] sm:$0xff]
  %v247 = vld [vmem:[%s2 + $0x80] sm:$0xff]
  %v248 = vld [vmem:[%s2 + $0x88] sm:$0xff]
  %v249 = vld [vmem:[%s2 + $0x90] sm:$0xff]
  %v250 = vld [vmem:[%s2 + $0x98] sm:$0xff]
  %v251 = vld [vmem:[%s2 + $0xa0] sm:$0xff]
  %v252 = vld [vmem:[%s2 + $0xa8] sm:$0xff]
  %v253 = vld [vmem:[%s2 + $0xb0] sm:$0xff]
  %v254 = vld [vmem:[%s2 + $0xb8] sm:$0xff]
  %v255 = vld [vmem:[%s2 + $0xc0] sm:$0xff]
  %v256 = vld [vmem:[%s2 + $0xc8] sm:$0xff]
  %v257 = vld [vmem:[%s2 + $0xd0] sm:$0xff]
  %v258 = vld [vmem:[%s2 + $0xd8] sm:$0xff]
  %v259 = vld [vmem:[%s2 + $0xe0] sm:$0xff]
  %v260 = vld [vmem:[%s2 + $0xe8] sm:$0xff]
  %v261 = vld [vmem:[%s2 + $0xf0] sm:$0xff]
  %v262 = vld [vmem:[%s2 + $0xf8] sm:$0xff]
  %v263 = vld [vmem:[%s2 + $0x100] sm:$0xff]
  %v264 = vld [vmem:[%s2 + $0x108] sm:$0xff]
  %v265 = vld [vmem:[%s2 + $0x110] sm:$0xff]
  %v266 = vld [vmem:[%s2 + $0x118] sm:$0xff]
  %v267 = vld [vmem:[%s2 + $0x120] sm:$0xff]
  %v268 = vld [vmem:[%s2 + $0x128] sm:$0xff]
  %v269 = vld [vmem:[%s2 + $0x130] sm:$0xff]
  %v270 = vld [vmem:[%s2 + $0x138] sm:$0xff]
  %v271 = vld [vmem:[%s2 + $0x140] sm:$0xff]
  %v272 = vld [vmem:[%s2 + $0x148] sm:$0xff]
  %v273 = vld [vmem:[%s2 + $0x150] sm:$0xff]
  %v274 = vld [vmem:[%s2 + $0x158] sm:$0xff]
  %v275 = vld [vmem:[%s2 + $0x160] sm:$0xff]
  %v276 = vld [vmem:[%s2 + $0x168] sm:$0xff]
  %v277 = vld [vmem:[%s2 + $0x170] sm:$0xff]
  %v278 = vld [vmem:[%s2 + $0x178] sm:$0xff]
  %v279 = vld [vmem:[%s4] sm:$0x1]
  %s280 = smul.u32 0, 3
  %s281 = smul.addr %s280, 8
  %s282 = scalar_lea.vmem [#allocation2], %s281
  %v283 = vld [vmem:[%s282] sm:$0xff]
  %v284 = vld [vmem:[%s282 + $0x8] sm:$0xff]
  %v285 = vld [vmem:[%s282 + $0x10] sm:$0xff]
  %286 = vmatpush.msra.mxu0 %v276
  %287 = vmatpush.msra.mxu0 %v273
  %288 = vmatpush.msra.mxu0 %v270
  %289 = vmatpush.msra.mxu0 %v267
  %290 = vmatpush.msra.mxu0 %v264
  %291 = vmatpush.msra.mxu0 %v261
  %292 = vmatpush.msra.mxu0 %v258
  %293 = vmatpush.msra.mxu0 %v255
  %294 = vmatpush.msra.mxu0 %v252
  %295 = vmatpush.msra.mxu0 %v249
  %296 = vmatpush.msra.mxu0 %v246
  %297 = vmatpush.msra.mxu0 %v243
  %298 = vmatpush.msra.mxu0 %v240
  %299 = vmatpush.msra.mxu0 %v237
  %300 = vmatpush.msra.mxu0 %v234
  %301 = vmatpush.msra.mxu0 %v231
  %302 = vmatmul.f32.gmra.mxu0 0.0
  %v303 = vpop.f32.mrf.mxu0
  %v304 = vadd.f32 0.0, %v303
  %305 = vdwg.mxu0
  %306 = vmatpush.msra.mxu0 %v277
  %307 = vmatpush.msra.mxu0 %v274
  %308 = vmatpush.msra.mxu0 %v271
  %309 = vmatpush.msra.mxu0 %v268
  %310 = vmatpush.msra.mxu0 %v265
  %311 = vmatpush.msra.mxu0 %v262
  %312 = vmatpush.msra.mxu0 %v259
  %313 = vmatpush.msra.mxu0 %v256
  %314 = vmatpush.msra.mxu0 %v253
  %315 = vmatpush.msra.mxu0 %v250
  %316 = vmatpush.msra.mxu0 %v247
  %317 = vmatpush.msra.mxu0 %v244
  %318 = vmatpush.msra.mxu0 %v241
  %319 = vmatpush.msra.mxu0 %v238
  %320 = vmatpush.msra.mxu0 %v235
  %321 = vmatpush.msra.mxu0 %v232
  %322 = vmatmul.f32.gmra.mxu0 0.0
  %v323 = vpop.f32.mrf.mxu0
  %v324 = vadd.f32 0.0, %v323
  %325 = vdwg.mxu0
  %326 = vmatpush.msra.mxu0 %v278
  %327 = vmatpush.msra.mxu0 %v275
  %328 = vmatpush.msra.mxu0 %v272
  %329 = vmatpush.msra.mxu0 %v269
  %330 = vmatpush.msra.mxu0 %v266
  %331 = vmatpush.msra.mxu0 %v263
  %332 = vmatpush.msra.mxu0 %v260
  %333 = vmatpush.msra.mxu0 %v257
  %334 = vmatpush.msra.mxu0 %v254
  %335 = vmatpush.msra.mxu0 %v251
  %336 = vmatpush.msra.mxu0 %v248
  %337 = vmatpush.msra.mxu0 %v245
  %338 = vmatpush.msra.mxu0 %v242
  %339 = vmatpush.msra.mxu0 %v239
  %340 = vmatpush.msra.mxu0 %v236
  %341 = vmatpush.msra.mxu0 %v233
  %342 = vmatmul.f32.gmra.mxu0 0.0
  %v343 = vpop.f32.mrf.mxu0
  %v344 = vadd.f32 0.0, %v343
  %345 = vdwg.mxu0
  %v346 = vadd.f32 %v283, %v304
  %v347 = vxor.u32 %v346, 2147483648
  %v348 = vmul.f32 %v347, 1.442695
  %v349 = vpow.pop %v348
  %v350 = vadd.f32 %v349, 1.0
  %v351 = vrcp.pop %v350
  %v352 = vmul.f32 %v350, %v351
  %v353 = vsub.f32 1.0, %v352
  %v354 = vmul.f32 %v351, %v353
  %v355 = vadd.f32 %v351, %v354
  %vm356 = vweird.f32 %v350
  %vm357 = vweird.f32 %v351
  %vm358 = vmor %vm356, %vm357
  %v359 = vsel %vm358, %v351, %v355
  %v360 = vand.u32 2147483647, %v350
  %vm361 = vcmp.eq.f32.partialorder %v360, 8.507059e+37
  %v362 = vand.u32 %v350, 2147483648
  %v363 = vor.u32 1.1754944e-38, %v362
  %v364 = vsel %vm361, %v363, %v359
  %v365 = vmul.f32 1.0, %v364
  %v366 = vadd.f32 %v284, %v324
  %v367 = vxor.u32 %v366, 2147483648
  %v368 = vmul.f32 %v367, 1.442695
  %v369 = vpow.pop %v368
  %v370 = vadd.f32 %v369, 1.0
  %v371 = vrcp.pop %v370
  %v372 = vmul.f32 %v370, %v371
  %v373 = vsub.f32 1.0, %v372
  %v374 = vmul.f32 %v371, %v373
  %v375 = vadd.f32 %v371, %v374
  %vm376 = vweird.f32 %v370
  %vm377 = vweird.f32 %v371
  %vm378 = vmor %vm376, %vm377
  %v379 = vsel %vm378, %v371, %v375
  %v380 = vand.u32 2147483647, %v370
  %vm381 = vcmp.eq.f32.partialorder %v380, 8.507059e+37
  %v382 = vand.u32 %v370, 2147483648
  %v383 = vor.u32 1.1754944e-38, %v382
  %v384 = vsel %vm381, %v383, %v379
  %v385 = vmul.f32 1.0, %v384
  %v387 = vperm.slane %v279, 0
  %v389 = vadd.f32 %v344, %v387
  %v390 = vmul.f32 %v365, %v389
  %v391 = vadd.f32 %v285, %v390
  %v392 = vtanh.pop %v391
  %v393 = vsub.f32 1.0, %v385
  %v394 = vmul.f32 %v393, %v392
  %v395 = vmul.f32 %v385, 0.0
  %v396 = vadd.f32 %v394, %v395
  %397 = vst [vmem:[%s282] sm:$0xff] %v396
  %s398 = smul.u32 1, 3
  %s399 = smul.addr %s398, 8
  %s400 = scalar_lea.vmem [#allocation2], %s399
  %v401 = vld [vmem:[%s400] sm:$0xff]
  %v402 = vld [vmem:[%s400 + $0x8] sm:$0xff]
  %v403 = vld [vmem:[%s400 + $0x10] sm:$0xff]
  %404 = vmatpush.msra.mxu0 %v276
  %405 = vmatpush.msra.mxu0 %v273
  %406 = vmatpush.msra.mxu0 %v270
  %407 = vmatpush.msra.mxu0 %v267
  %408 = vmatpush.msra.mxu0 %v264
  %409 = vmatpush.msra.mxu0 %v261
  %410 = vmatpush.msra.mxu0 %v258
  %411 = vmatpush.msra.mxu0 %v255
  %412 = vmatpush.msra.mxu0 %v252
  %413 = vmatpush.msra.mxu0 %v249
  %414 = vmatpush.msra.mxu0 %v246
  %415 = vmatpush.msra.mxu0 %v243
  %416 = vmatpush.msra.mxu0 %v240
  %417 = vmatpush.msra.mxu0 %v237
  %418 = vmatpush.msra.mxu0 %v234
  %419 = vmatpush.msra.mxu0 %v231
  %420 = vmatmul.f32.gmra.mxu0 %v396
  %v421 = vpop.f32.mrf.mxu0
  %v422 = vadd.f32 0.0, %v421
  %423 = vdwg.mxu0
  %424 = vmatpush.msra.mxu0 %v277
  %425 = vmatpush.msra.mxu0 %v274
  %426 = vmatpush.msra.mxu0 %v271
  %427 = vmatpush.msra.mxu0 %v268
  %428 = vmatpush.msra.mxu0 %v265
  %429 = vmatpush.msra.mxu0 %v262
  %430 = vmatpush.msra.mxu0 %v259
  %431 = vmatpush.msra.mxu0 %v256
  %432 = vmatpush.msra.mxu0 %v253
  %433 = vmatpush.msra.mxu0 %v250
  %434 = vmatpush.msra.mxu0 %v247
  %435 = vmatpush.msra.mxu0 %v244
  %436 = vmatpush.msra.mxu0 %v241
  %437 = vmatpush.msra.mxu0 %v238
  %438 = vmatpush.msra.mxu0 %v235
  %439 = vmatpush.msra.mxu0 %v232
  %440 = vmatmul.f32.gmra.mxu0 %v396
  %v441 = vpop.f32.mrf.mxu0
  %v442 = vadd.f32 0.0, %v441
  %443 = vdwg.mxu0
  %444 = vmatpush.msra.mxu0 %v278
  %445 = vmatpush.msra.mxu0 %v275
  %446 = vmatpush.msra.mxu0 %v272
  %447 = vmatpush.msra.mxu0 %v269
  %448 = vmatpush.msra.mxu0 %v266
  %449 = vmatpush.msra.mxu0 %v263
  %450 = vmatpush.msra.mxu0 %v260
  %451 = vmatpush.msra.mxu0 %v257
  %452 = vmatpush.msra.mxu0 %v254
  %453 = vmatpush.msra.mxu0 %v251
  %454 = vmatpush.msra.mxu0 %v248
  %455 = vmatpush.msra.mxu0 %v245
  %456 = vmatpush.msra.mxu0 %v242
  %457 = vmatpush.msra.mxu0 %v239
  %458 = vmatpush.msra.mxu0 %v236
  %459 = vmatpush.msra.mxu0 %v233
  %460 = vmatmul.f32.gmra.mxu0 %v396
  %v461 = vpop.f32.mrf.mxu0
  %v462 = vadd.f32 0.0, %v461
  %463 = vdwg.mxu0
  %v464 = vadd.f32 %v401, %v422
  %v465 = vxor.u32 %v464, 2147483648
  %v466 = vmul.f32 %v465, 1.442695
  %v467 = vpow.pop %v466
  %v468 = vadd.f32 %v467, 1.0
  %v469 = vrcp.pop %v468
  %v470 = vmul.f32 %v468, %v469
  %v471 = vsub.f32 1.0, %v470
  %v472 = vmul.f32 %v469, %v471
  %v473 = vadd.f32 %v469, %v472
  %vm474 = vweird.f32 %v468
  %vm475 = vweird.f32 %v469
  %vm476 = vmor %vm474, %vm475
  %v477 = vsel %vm476, %v469, %v473
  %v478 = vand.u32 2147483647, %v468
  %vm479 = vcmp.eq.f32.partialorder %v478, 8.507059e+37
  %v480 = vand.u32 %v468, 2147483648
  %v481 = vor.u32 1.1754944e-38, %v480
  %v482 = vsel %vm479, %v481, %v477
  %v483 = vmul.f32 1.0, %v482
  %v484 = vadd.f32 %v402, %v442
  %v485 = vxor.u32 %v484, 2147483648
  %v486 = vmul.f32 %v485, 1.442695
  %v487 = vpow.pop %v486
  %v488 = vadd.f32 %v487, 1.0
  %v489 = vrcp.pop %v488
  %v490 = vmul.f32 %v488, %v489
  %v491 = vsub.f32 1.0, %v490
  %v492 = vmul.f32 %v489, %v491
  %v493 = vadd.f32 %v489, %v492
  %vm494 = vweird.f32 %v488
  %vm495 = vweird.f32 %v489
  %vm496 = vmor %vm494, %vm495
  %v497 = vsel %vm496, %v489, %v493
  %v498 = vand.u32 2147483647, %v488
  %vm499 = vcmp.eq.f32.partialorder %v498, 8.507059e+37
  %v500 = vand.u32 %v488, 2147483648
  %v501 = vor.u32 1.1754944e-38, %v500
  %v502 = vsel %vm499, %v501, %v497
  %v503 = vmul.f32 1.0, %v502
  %v504 = vadd.f32 %v462, %v387
  %v505 = vmul.f32 %v483, %v504
  %v506 = vadd.f32 %v403, %v505
  %v507 = vtanh.pop %v506
  %v508 = vsub.f32 1.0, %v503
  %v509 = vmul.f32 %v508, %v507
  %v510 = vmul.f32 %v503, %v396
  %v511 = vadd.f32 %v509, %v510
  %512 = vst [vmem:[%s400] sm:$0xff] %v511
  %s513 = smul.u32 2, 3
  %s514 = smul.addr %s513, 8
  %s515 = scalar_lea.vmem [#allocation2], %s514
  %v516 = vld [vmem:[%s515] sm:$0xff]
  %v517 = vld [vmem:[%s515 + $0x8] sm:$0xff]
  %v518 = vld [vmem:[%s515 + $0x10] sm:$0xff]
  %519 = vmatpush.msra.mxu0 %v276
  %520 = vmatpush.msra.mxu0 %v273
  %521 = vmatpush.msra.mxu0 %v270
  %522 = vmatpush.msra.mxu0 %v267
  %523 = vmatpush.msra.mxu0 %v264
  %524 = vmatpush.msra.mxu0 %v261
  %525 = vmatpush.msra.mxu0 %v258
  %526 = vmatpush.msra.mxu0 %v255
  %527 = vmatpush.msra.mxu0 %v252
  %528 = vmatpush.msra.mxu0 %v249
  %529 = vmatpush.msra.mxu0 %v246
  %530 = vmatpush.msra.mxu0 %v243
  %531 = vmatpush.msra.mxu0 %v240
  %532 = vmatpush.msra.mxu0 %v237
  %533 = vmatpush.msra.mxu0 %v234
  %534 = vmatpush.msra.mxu0 %v231
  %535 = vmatmul.f32.gmra.mxu0 %v511
  %v536 = vpop.f32.mrf.mxu0
  %v537 = vadd.f32 0.0, %v536
  %538 = vdwg.mxu0
  %539 = vmatpush.msra.mxu0 %v277
  %540 = vmatpush.msra.mxu0 %v274
  %541 = vmatpush.msra.mxu0 %v271
  %542 = vmatpush.msra.mxu0 %v268
  %543 = vmatpush.msra.mxu0 %v265
  %544 = vmatpush.msra.mxu0 %v262
  %545 = vmatpush.msra.mxu0 %v259
  %546 = vmatpush.msra.mxu0 %v256
  %547 = vmatpush.msra.mxu0 %v253
  %548 = vmatpush.msra.mxu0 %v250
  %549 = vmatpush.msra.mxu0 %v247
  %550 = vmatpush.msra.mxu0 %v244
  %551 = vmatpush.msra.mxu0 %v241
  %552 = vmatpush.msra.mxu0 %v238
  %553 = vmatpush.msra.mxu0 %v235
  %554 = vmatpush.msra.mxu0 %v232
  %555 = vmatmul.f32.gmra.mxu0 %v511
  %v556 = vpop.f32.mrf.mxu0
  %v557 = vadd.f32 0.0, %v556
  %558 = vdwg.mxu0
  %559 = vmatpush.msra.mxu0 %v278
  %560 = vmatpush.msra.mxu0 %v275
  %561 = vmatpush.msra.mxu0 %v272
  %562 = vmatpush.msra.mxu0 %v269
  %563 = vmatpush.msra.mxu0 %v266
  %564 = vmatpush.msra.mxu0 %v263
  %565 = vmatpush.msra.mxu0 %v260
  %566 = vmatpush.msra.mxu0 %v257
  %567 = vmatpush.msra.mxu0 %v254
  %568 = vmatpush.msra.mxu0 %v251
  %569 = vmatpush.msra.mxu0 %v248
  %570 = vmatpush.msra.mxu0 %v245
  %571 = vmatpush.msra.mxu0 %v242
  %572 = vmatpush.msra.mxu0 %v239
  %573 = vmatpush.msra.mxu0 %v236
  %574 = vmatpush.msra.mxu0 %v233
  %575 = vmatmul.f32.gmra.mxu0 %v511
  %v576 = vpop.f32.mrf.mxu0
  %v577 = vadd.f32 0.0, %v576
  %578 = vdwg.mxu0
  %v579 = vadd.f32 %v516, %v537
  %v580 = vxor.u32 %v579, 2147483648
  %v581 = vmul.f32 %v580, 1.442695
  %v582 = vpow.pop %v581
  %v583 = vadd.f32 %v582, 1.0
  %v584 = vrcp.pop %v583
  %v585 = vmul.f32 %v583, %v584
  %v586 = vsub.f32 1.0, %v585
  %v587 = vmul.f32 %v584, %v586
  %v588 = vadd.f32 %v584, %v587
  %vm589 = vweird.f32 %v583
  %vm590 = vweird.f32 %v584
  %vm591 = vmor %vm589, %vm590
  %v592 = vsel %vm591, %v584, %v588
  %v593 = vand.u32 2147483647, %v583
  %vm594 = vcmp.eq.f32.partialorder %v593, 8.507059e+37
  %v595 = vand.u32 %v583, 2147483648
  %v596 = vor.u32 1.1754944e-38, %v595
  %v597 = vsel %vm594, %v596, %v592
  %v598 = vmul.f32 1.0, %v597
  %v599 = vadd.f32 %v517, %v557
  %v600 = vxor.u32 %v599, 2147483648
  %v601 = vmul.f32 %v600, 1.442695
  %v602 = vpow.pop %v601
  %v603 = vadd.f32 %v602, 1.0
  %v604 = vrcp.pop %v603
  %v605 = vmul.f32 %v603, %v604
  %v606 = vsub.f32 1.0, %v605
  %v607 = vmul.f32 %v604, %v606
  %v608 = vadd.f32 %v604, %v607
  %vm609 = vweird.f32 %v603
  %vm610 = vweird.f32 %v604
  %vm611 = vmor %vm609, %vm610
  %v612 = vsel %vm611, %v604, %v608
  %v613 = vand.u32 2147483647, %v603
  %vm614 = vcmp.eq.f32.partialorder %v613, 8.507059e+37
  %v615 = vand.u32 %v603, 2147483648
  %v616 = vor.u32 1.1754944e-38, %v615
  %v617 = vsel %vm614, %v616, %v612
  %v618 = vmul.f32 1.0, %v617
  %v619 = vadd.f32 %v577, %v387
  %v620 = vmul.f32 %v598, %v619
  %v621 = vadd.f32 %v518, %v620
  %v622 = vtanh.pop %v621
  %v623 = vsub.f32 1.0, %v618
  %v624 = vmul.f32 %v623, %v622
  %v625 = vmul.f32 %v618, %v511
  %v626 = vadd.f32 %v624, %v625
  %627 = vst [vmem:[%s515] sm:$0xff] %v626
  %s628 = smul.u32 3, 3
  %s629 = smul.addr %s628, 8
  %s630 = scalar_lea.vmem [#allocation2], %s629
  %v631 = vld [vmem:[%s630] sm:$0xff]
  %v632 = vld [vmem:[%s630 + $0x8] sm:$0xff]
  %v633 = vld [vmem:[%s630 + $0x10] sm:$0xff]
  %634 = vmatpush.msra.mxu0 %v276
  %635 = vmatpush.msra.mxu0 %v273
  %636 = vmatpush.msra.mxu0 %v270
  %637 = vmatpush.msra.mxu0 %v267
  %638 = vmatpush.msra.mxu0 %v264
  %639 = vmatpush.msra.mxu0 %v261
  %640 = vmatpush.msra.mxu0 %v258
  %641 = vmatpush.msra.mxu0 %v255
  %642 = vmatpush.msra.mxu0 %v252
  %643 = vmatpush.msra.mxu0 %v249
  %644 = vmatpush.msra.mxu0 %v246
  %645 = vmatpush.msra.mxu0 %v243
  %646 = vmatpush.msra.mxu0 %v240
  %647 = vmatpush.msra.mxu0 %v237
  %648 = vmatpush.msra.mxu0 %v234
  %649 = vmatpush.msra.mxu0 %v231
  %650 = vmatmul.f32.gmra.mxu0 %v626
  %v651 = vpop.f32.mrf.mxu0
  %v652 = vadd.f32 0.0, %v651
  %653 = vdwg.mxu0
  %654 = vmatpush.msra.mxu0 %v277
  %655 = vmatpush.msra.mxu0 %v274
  %656 = vmatpush.msra.mxu0 %v271
  %657 = vmatpush.msra.mxu0 %v268
  %658 = vmatpush.msra.mxu0 %v265
  %659 = vmatpush.msra.mxu0 %v262
  %660 = vmatpush.msra.mxu0 %v259
  %661 = vmatpush.msra.mxu0 %v256
  %662 = vmatpush.msra.mxu0 %v253
  %663 = vmatpush.msra.mxu0 %v250
  %664 = vmatpush.msra.mxu0 %v247
  %665 = vmatpush.msra.mxu0 %v244
  %666 = vmatpush.msra.mxu0 %v241
  %667 = vmatpush.msra.mxu0 %v238
  %668 = vmatpush.msra.mxu0 %v235
  %669 = vmatpush.msra.mxu0 %v232
  %670 = vmatmul.f32.gmra.mxu0 %v626
  %v671 = vpop.f32.mrf.mxu0
  %v672 = vadd.f32 0.0, %v671
  %673 = vdwg.mxu0
  %674 = vmatpush.msra.mxu0 %v278
  %675 = vmatpush.msra.mxu0 %v275
  %676 = vmatpush.msra.mxu0 %v272
  %677 = vmatpush.msra.mxu0 %v269
  %678 = vmatpush.msra.mxu0 %v266
  %679 = vmatpush.msra.mxu0 %v263
  %680 = vmatpush.msra.mxu0 %v260
  %681 = vmatpush.msra.mxu0 %v257
  %682 = vmatpush.msra.mxu0 %v254
  %683 = vmatpush.msra.mxu0 %v251
  %684 = vmatpush.msra.mxu0 %v248
  %685 = vmatpush.msra.mxu0 %v245
  %686 = vmatpush.msra.mxu0 %v242
  %687 = vmatpush.msra.mxu0 %v239
  %688 = vmatpush.msra.mxu0 %v236
  %689 = vmatpush.msra.mxu0 %v233
  %690 = vmatmul.f32.gmra.mxu0 %v626
  %v691 = vpop.f32.mrf.mxu0
  %v692 = vadd.f32 0.0, %v691
  %693 = vdwg.mxu0
  %v694 = vadd.f32 %v631, %v652
  %v695 = vxor.u32 %v694, 2147483648
  %v696 = vmul.f32 %v695, 1.442695
  %v697 = vpow.pop %v696
  %v698 = vadd.f32 %v697, 1.0
  %v699 = vrcp.pop %v698
  %v700 = vmul.f32 %v698, %v699
  %v701 = vsub.f32 1.0, %v700
  %v702 = vmul.f32 %v699, %v701
  %v703 = vadd.f32 %v699, %v702
  %vm704 = vweird.f32 %v698
  %vm705 = vweird.f32 %v699
  %vm706 = vmor %vm704, %vm705
  %v707 = vsel %vm706, %v699, %v703
  %v708 = vand.u32 2147483647, %v698
  %vm709 = vcmp.eq.f32.partialorder %v708, 8.507059e+37
  %v710 = vand.u32 %v698, 2147483648
  %v711 = vor.u32 1.1754944e-38, %v710
  %v712 = vsel %vm709, %v711, %v707
  %v713 = vmul.f32 1.0, %v712
  %v714 = vadd.f32 %v632, %v672
  %v715 = vxor.u32 %v714, 2147483648
  %v716 = vmul.f32 %v715, 1.442695
  %v717 = vpow.pop %v716
  %v718 = vadd.f32 %v717, 1.0
  %v719 = vrcp.pop %v718
  %v720 = vmul.f32 %v718, %v719
  %v721 = vsub.f32 1.0, %v720
  %v722 = vmul.f32 %v719, %v721
  %v723 = vadd.f32 %v719, %v722
  %vm724 = vweird.f32 %v718
  %vm725 = vweird.f32 %v719
  %vm726 = vmor %vm724, %vm725
  %v727 = vsel %vm726, %v719, %v723
  %v728 = vand.u32 2147483647, %v718
  %vm729 = vcmp.eq.f32.partialorder %v728, 8.507059e+37
  %v730 = vand.u32 %v718, 2147483648
  %v731 = vor.u32 1.1754944e-38, %v730
  %v732 = vsel %vm729, %v731, %v727
  %v733 = vmul.f32 1.0, %v732
  %v734 = vadd.f32 %v692, %v387
  %v735 = vmul.f32 %v713, %v734
  %v736 = vadd.f32 %v633, %v735
  %v737 = vtanh.pop %v736
  %v738 = vsub.f32 1.0, %v733
  %v739 = vmul.f32 %v738, %v737
  %v740 = vmul.f32 %v733, %v626
  %v741 = vadd.f32 %v739, %v740
  %742 = vst [vmem:[%s630] sm:$0xff] %v741
  %s743 = smul.u32 4, 3
  %s744 = smul.addr %s743, 8
  %s745 = scalar_lea.vmem [#allocation2], %s744
  %v746 = vld [vmem:[%s745] sm:$0xff]
  %v747 = vld [vmem:[%s745 + $0x8] sm:$0xff]
  %v748 = vld [vmem:[%s745 + $0x10] sm:$0xff]
  %749 = vmatpush.msra.mxu0 %v276
  %750 = vmatpush.msra.mxu0 %v273
  %751 = vmatpush.msra.mxu0 %v270
  %752 = vmatpush.msra.mxu0 %v267
  %753 = vmatpush.msra.mxu0 %v264
  %754 = vmatpush.msra.mxu0 %v261
  %755 = vmatpush.msra.mxu0 %v258
  %756 = vmatpush.msra.mxu0 %v255
  %757 = vmatpush.msra.mxu0 %v252
  %758 = vmatpush.msra.mxu0 %v249
  %759 = vmatpush.msra.mxu0 %v246
  %760 = vmatpush.msra.mxu0 %v243
  %761 = vmatpush.msra.mxu0 %v240
  %762 = vmatpush.msra.mxu0 %v237
  %763 = vmatpush.msra.mxu0 %v234
  %764 = vmatpush.msra.mxu0 %v231
  %765 = vmatmul.f32.gmra.mxu0 %v741
  %v766 = vpop.f32.mrf.mxu0
  %v767 = vadd.f32 0.0, %v766
  %768 = vdwg.mxu0
  %769 = vmatpush.msra.mxu0 %v277
  %770 = vmatpush.msra.mxu0 %v274
  %771 = vmatpush.msra.mxu0 %v271
  %772 = vmatpush.msra.mxu0 %v268
  %773 = vmatpush.msra.mxu0 %v265
  %774 = vmatpush.msra.mxu0 %v262
  %775 = vmatpush.msra.mxu0 %v259
  %776 = vmatpush.msra.mxu0 %v256
  %777 = vmatpush.msra.mxu0 %v253
  %778 = vmatpush.msra.mxu0 %v250
  %779 = vmatpush.msra.mxu0 %v247
  %780 = vmatpush.msra.mxu0 %v244
  %781 = vmatpush.msra.mxu0 %v241
  %782 = vmatpush.msra.mxu0 %v238
  %783 = vmatpush.msra.mxu0 %v235
  %784 = vmatpush.msra.mxu0 %v232
  %785 = vmatmul.f32.gmra.mxu0 %v741
  %v786 = vpop.f32.mrf.mxu0
  %v787 = vadd.f32 0.0, %v786
  %788 = vdwg.mxu0
  %789 = vmatpush.msra.mxu0 %v278
  %790 = vmatpush.msra.mxu0 %v275
  %791 = vmatpush.msra.mxu0 %v272
  %792 = vmatpush.msra.mxu0 %v269
  %793 = vmatpush.msra.mxu0 %v266
  %794 = vmatpush.msra.mxu0 %v263
  %795 = vmatpush.msra.mxu0 %v260
  %796 = vmatpush.msra.mxu0 %v257
  %797 = vmatpush.msra.mxu0 %v254
  %798 = vmatpush.msra.mxu0 %v251
  %799 = vmatpush.msra.mxu0 %v248
  %800 = vmatpush.msra.mxu0 %v245
  %801 = vmatpush.msra.mxu0 %v242
  %802 = vmatpush.msra.mxu0 %v239
  %803 = vmatpush.msra.mxu0 %v236
  %804 = vmatpush.msra.mxu0 %v233
  %805 = vmatmul.f32.gmra.mxu0 %v741
  %v806 = vpop.f32.mrf.mxu0
  %v807 = vadd.f32 0.0, %v806
  %808 = vdwg.mxu0
  %v809 = vadd.f32 %v746, %v767
  %v810 = vxor.u32 %v809, 2147483648
  %v811 = vmul.f32 %v810, 1.442695
  %v812 = vpow.pop %v811
  %v813 = vadd.f32 %v812, 1.0
  %v814 = vrcp.pop %v813
  %v815 = vmul.f32 %v813, %v814
  %v816 = vsub.f32 1.0, %v815
  %v817 = vmul.f32 %v814, %v816
  %v818 = vadd.f32 %v814, %v817
  %vm819 = vweird.f32 %v813
  %vm820 = vweird.f32 %v814
  %vm821 = vmor %vm819, %vm820
  %v822 = vsel %vm821, %v814, %v818
  %v823 = vand.u32 2147483647, %v813
  %vm824 = vcmp.eq.f32.partialorder %v823, 8.507059e+37
  %v825 = vand.u32 %v813, 2147483648
  %v826 = vor.u32 1.1754944e-38, %v825
  %v827 = vsel %vm824, %v826, %v822
  %v828 = vmul.f32 1.0, %v827
  %v829 = vadd.f32 %v747, %v787
  %v830 = vxor.u32 %v829, 2147483648
  %v831 = vmul.f32 %v830, 1.442695
  %v832 = vpow.pop %v831
  %v833 = vadd.f32 %v832, 1.0
  %v834 = vrcp.pop %v833
  %v835 = vmul.f32 %v833, %v834
  %v836 = vsub.f32 1.0, %v835
  %v837 = vmul.f32 %v834, %v836
  %v838 = vadd.f32 %v834, %v837
  %vm839 = vweird.f32 %v833
  %vm840 = vweird.f32 %v834
  %vm841 = vmor %vm839, %vm840
  %v842 = vsel %vm841, %v834, %v838
  %v843 = vand.u32 2147483647, %v833
  %vm844 = vcmp.eq.f32.partialorder %v843, 8.507059e+37
  %v845 = vand.u32 %v833, 2147483648
  %v846 = vor.u32 1.1754944e-38, %v845
  %v847 = vsel %vm844, %v846, %v842
  %v848 = vmul.f32 1.0, %v847
  %v849 = vadd.f32 %v807, %v387
  %v850 = vmul.f32 %v828, %v849
  %v851 = vadd.f32 %v748, %v850
  %v852 = vtanh.pop %v851
  %v853 = vsub.f32 1.0, %v848
  %v854 = vmul.f32 %v853, %v852
  %v855 = vmul.f32 %v848, %v741
  %v856 = vadd.f32 %v854, %v855
  %857 = vst [vmem:[%s745] sm:$0xff] %v856
  %s858 = smul.u32 5, 3
  %s859 = smul.addr %s858, 8
  %s860 = scalar_lea.vmem [#allocation2], %s859
  %v861 = vld [vmem:[%s860] sm:$0xff]
  %v862 = vld [vmem:[%s860 + $0x8] sm:$0xff]
  %v863 = vld [vmem:[%s860 + $0x10] sm:$0xff]
  %864 = vmatpush.msra.mxu0 %v276
  %865 = vmatpush.msra.mxu0 %v273
  %866 = vmatpush.msra.mxu0 %v270
  %867 = vmatpush.msra.mxu0 %v267
  %868 = vmatpush.msra.mxu0 %v264
  %869 = vmatpush.msra.mxu0 %v261
  %870 = vmatpush.msra.mxu0 %v258
  %871 = vmatpush.msra.mxu0 %v255
  %872 = vmatpush.msra.mxu0 %v252
  %873 = vmatpush.msra.mxu0 %v249
  %874 = vmatpush.msra.mxu0 %v246
  %875 = vmatpush.msra.mxu0 %v243
  %876 = vmatpush.msra.mxu0 %v240
  %877 = vmatpush.msra.mxu0 %v237
  %878 = vmatpush.msra.mxu0 %v234
  %879 = vmatpush.msra.mxu0 %v231
  %880 = vmatmul.f32.gmra.mxu0 %v856
  %v881 = vpop.f32.mrf.mxu0
  %v882 = vadd.f32 0.0, %v881
  %883 = vdwg.mxu0
  %884 = vmatpush.msra.mxu0 %v277
  %885 = vmatpush.msra.mxu0 %v274
  %886 = vmatpush.msra.mxu0 %v271
  %887 = vmatpush.msra.mxu0 %v268
  %888 = vmatpush.msra.mxu0 %v265
  %889 = vmatpush.msra.mxu0 %v262
  %890 = vmatpush.msra.mxu0 %v259
  %891 = vmatpush.msra.mxu0 %v256
  %892 = vmatpush.msra.mxu0 %v253
  %893 = vmatpush.msra.mxu0 %v250
  %894 = vmatpush.msra.mxu0 %v247
  %895 = vmatpush.msra.mxu0 %v244
  %896 = vmatpush.msra.mxu0 %v241
  %897 = vmatpush.msra.mxu0 %v238
  %898 = vmatpush.msra.mxu0 %v235
  %899 = vmatpush.msra.mxu0 %v232
  %900 = vmatmul.f32.gmra.mxu0 %v856
  %v901 = vpop.f32.mrf.mxu0
  %v902 = vadd.f32 0.0, %v901
  %903 = vdwg.mxu0
  %904 = vmatpush.msra.mxu0 %v278
  %905 = vmatpush.msra.mxu0 %v275
  %906 = vmatpush.msra.mxu0 %v272
  %907 = vmatpush.msra.mxu0 %v269
  %908 = vmatpush.msra.mxu0 %v266
  %909 = vmatpush.msra.mxu0 %v263
  %910 = vmatpush.msra.mxu0 %v260
  %911 = vmatpush.msra.mxu0 %v257
  %912 = vmatpush.msra.mxu0 %v254
  %913 = vmatpush.msra.mxu0 %v251
  %914 = vmatpush.msra.mxu0 %v248
  %915 = vmatpush.msra.mxu0 %v245
  %916 = vmatpush.msra.mxu0 %v242
  %917 = vmatpush.msra.mxu0 %v239
  %918 = vmatpush.msra.mxu0 %v236
  %919 = vmatpush.msra.mxu0 %v233
  %920 = vmatmul.f32.gmra.mxu0 %v856
  %v921 = vpop.f32.mrf.mxu0
  %v922 = vadd.f32 0.0, %v921
  %923 = vdwg.mxu0
  %v924 = vadd.f32 %v861, %v882
  %v925 = vxor.u32 %v924, 2147483648
  %v926 = vmul.f32 %v925, 1.442695
  %v927 = vpow.pop %v926
  %v928 = vadd.f32 %v927, 1.0
  %v929 = vrcp.pop %v928
  %v930 = vmul.f32 %v928, %v929
  %v931 = vsub.f32 1.0, %v930
  %v932 = vmul.f32 %v929, %v931
  %v933 = vadd.f32 %v929, %v932
  %vm934 = vweird.f32 %v928
  %vm935 = vweird.f32 %v929
  %vm936 = vmor %vm934, %vm935
  %v937 = vsel %vm936, %v929, %v933
  %v938 = vand.u32 2147483647, %v928
  %vm939 = vcmp.eq.f32.partialorder %v938, 8.507059e+37
  %v940 = vand.u32 %v928, 2147483648
  %v941 = vor.u32 1.1754944e-38, %v940
  %v942 = vsel %vm939, %v941, %v937
  %v943 = vmul.f32 1.0, %v942
  %v944 = vadd.f32 %v862, %v902
  %v945 = vxor.u32 %v944, 2147483648
  %v946 = vmul.f32 %v945, 1.442695
  %v947 = vpow.pop %v946
  %v948 = vadd.f32 %v947, 1.0
  %v949 = vrcp.pop %v948
  %v950 = vmul.f32 %v948, %v949
  %v951 = vsub.f32 1.0, %v950
  %v952 = vmul.f32 %v949, %v951
  %v953 = vadd.f32 %v949, %v952
  %vm954 = vweird.f32 %v948
  %vm955 = vweird.f32 %v949
  %vm956 = vmor %vm954, %vm955
  %v957 = vsel %vm956, %v949, %v953
  %v958 = vand.u32 2147483647, %v948
  %vm959 = vcmp.eq.f32.partialorder %v958, 8.507059e+37
  %v960 = vand.u32 %v948, 2147483648
  %v961 = vor.u32 1.1754944e-38, %v960
  %v962 = vsel %vm959, %v961, %v957
  %v963 = vmul.f32 1.0, %v962
  %v964 = vadd.f32 %v922, %v387
  %v965 = vmul.f32 %v943, %v964
  %v966 = vadd.f32 %v863, %v965
  %v967 = vtanh.pop %v966
  %v968 = vsub.f32 1.0, %v963
  %v969 = vmul.f32 %v968, %v967
  %v970 = vmul.f32 %v963, %v856
  %v971 = vadd.f32 %v969, %v970
  %972 = vst [vmem:[%s860] sm:$0xff] %v971
  %s973 = smul.u32 6, 3
  %s974 = smul.addr %s973, 8
  %s975 = scalar_lea.vmem [#allocation2], %s974
  %v976 = vld [vmem:[%s975] sm:$0xff]
  %v977 = vld [vmem:[%s975 + $0x8] sm:$0xff]
  %v978 = vld [vmem:[%s975 + $0x10] sm:$0xff]
  %979 = vmatpush.msra.mxu0 %v276
  %980 = vmatpush.msra.mxu0 %v273
  %981 = vmatpush.msra.mxu0 %v270
  %982 = vmatpush.msra.mxu0 %v267
  %983 = vmatpush.msra.mxu0 %v264
  %984 = vmatpush.msra.mxu0 %v261
  %985 = vmatpush.msra.mxu0 %v258
  %986 = vmatpush.msra.mxu0 %v255
  %987 = vmatpush.msra.mxu0 %v252
  %988 = vmatpush.msra.mxu0 %v249
  %989 = vmatpush.msra.mxu0 %v246
  %990 = vmatpush.msra.mxu0 %v243
  %991 = vmatpush.msra.mxu0 %v240
  %992 = vmatpush.msra.mxu0 %v237
  %993 = vmatpush.msra.mxu0 %v234
  %994 = vmatpush.msra.mxu0 %v231
  %995 = vmatmul.f32.gmra.mxu0 %v971
  %v996 = vpop.f32.mrf.mxu0
  %v997 = vadd.f32 0.0, %v996
  %998 = vdwg.mxu0
  %999 = vmatpush.msra.mxu0 %v277
  %1000 = vmatpush.msra.mxu0 %v274
  %1001 = vmatpush.msra.mxu0 %v271
  %1002 = vmatpush.msra.mxu0 %v268
  %1003 = vmatpush.msra.mxu0 %v265
  %1004 = vmatpush.msra.mxu0 %v262
  %1005 = vmatpush.msra.mxu0 %v259
  %1006 = vmatpush.msra.mxu0 %v256
  %1007 = vmatpush.msra.mxu0 %v253
  %1008 = vmatpush.msra.mxu0 %v250
  %1009 = vmatpush.msra.mxu0 %v247
  %1010 = vmatpush.msra.mxu0 %v244
  %1011 = vmatpush.msra.mxu0 %v241
  %1012 = vmatpush.msra.mxu0 %v238
  %1013 = vmatpush.msra.mxu0 %v235
  %1014 = vmatpush.msra.mxu0 %v232
  %1015 = vmatmul.f32.gmra.mxu0 %v971
  %v1016 = vpop.f32.mrf.mxu0
  %v1017 = vadd.f32 0.0, %v1016
  %1018 = vdwg.mxu0
  %1019 = vmatpush.msra.mxu0 %v278
  %1020 = vmatpush.msra.mxu0 %v275
  %1021 = vmatpush.msra.mxu0 %v272
  %1022 = vmatpush.msra.mxu0 %v269
  %1023 = vmatpush.msra.mxu0 %v266
  %1024 = vmatpush.msra.mxu0 %v263
  %1025 = vmatpush.msra.mxu0 %v260
  %1026 = vmatpush.msra.mxu0 %v257
  %1027 = vmatpush.msra.mxu0 %v254
  %1028 = vmatpush.msra.mxu0 %v251
  %1029 = vmatpush.msra.mxu0 %v248
  %1030 = vmatpush.msra.mxu0 %v245
  %1031 = vmatpush.msra.mxu0 %v242
  %1032 = vmatpush.msra.mxu0 %v239
  %1033 = vmatpush.msra.mxu0 %v236
  %1034 = vmatpush.msra.mxu0 %v233
  %1035 = vmatmul.f32.gmra.mxu0 %v971
  %v1036 = vpop.f32.mrf.mxu0
  %v1037 = vadd.f32 0.0, %v1036
  %1038 = vdwg.mxu0
  %v1039 = vadd.f32 %v976, %v997
  %v1040 = vxor.u32 %v1039, 2147483648
  %v1041 = vmul.f32 %v1040, 1.442695
  %v1042 = vpow.pop %v1041
  %v1043 = vadd.f32 %v1042, 1.0
  %v1044 = vrcp.pop %v1043
  %v1045 = vmul.f32 %v1043, %v1044
  %v1046 = vsub.f32 1.0, %v1045
  %v1047 = vmul.f32 %v1044, %v1046
  %v1048 = vadd.f32 %v1044, %v1047
  %vm1049 = vweird.f32 %v1043
  %vm1050 = vweird.f32 %v1044
  %vm1051 = vmor %vm1049, %vm1050
  %v1052 = vsel %vm1051, %v1044, %v1048
  %v1053 = vand.u32 2147483647, %v1043
  %vm1054 = vcmp.eq.f32.partialorder %v1053, 8.507059e+37
  %v1055 = vand.u32 %v1043, 2147483648
  %v1056 = vor.u32 1.1754944e-38, %v1055
  %v1057 = vsel %vm1054, %v1056, %v1052
  %v1058 = vmul.f32 1.0, %v1057
  %v1059 = vadd.f32 %v977, %v1017
  %v1060 = vxor.u32 %v1059, 2147483648
  %v1061 = vmul.f32 %v1060, 1.442695
  %v1062 = vpow.pop %v1061
  %v1063 = vadd.f32 %v1062, 1.0
  %v1064 = vrcp.pop %v1063
  %v1065 = vmul.f32 %v1063, %v1064
  %v1066 = vsub.f32 1.0, %v1065
  %v1067 = vmul.f32 %v1064, %v1066
  %v1068 = vadd.f32 %v1064, %v1067
  %vm1069 = vweird.f32 %v1063
  %vm1070 = vweird.f32 %v1064
  %vm1071 = vmor %vm1069, %vm1070
  %v1072 = vsel %vm1071, %v1064, %v1068
  %v1073 = vand.u32 2147483647, %v1063
  %vm1074 = vcmp.eq.f32.partialorder %v1073, 8.507059e+37
  %v1075 = vand.u32 %v1063, 2147483648
  %v1076 = vor.u32 1.1754944e-38, %v1075
  %v1077 = vsel %vm1074, %v1076, %v1072
  %v1078 = vmul.f32 1.0, %v1077
  %v1079 = vadd.f32 %v1037, %v387
  %v1080 = vmul.f32 %v1058, %v1079
  %v1081 = vadd.f32 %v978, %v1080
  %v1082 = vtanh.pop %v1081
  %v1083 = vsub.f32 1.0, %v1078
  %v1084 = vmul.f32 %v1083, %v1082
  %v1085 = vmul.f32 %v1078, %v971
  %v1086 = vadd.f32 %v1084, %v1085
  %1087 = vst [vmem:[%s975] sm:$0xff] %v1086
  %s1088 = smul.u32 7, 3
  %s1089 = smul.addr %s1088, 8
  %s1090 = scalar_lea.vmem [#allocation2], %s1089
  %v1091 = vld [vmem:[%s1090] sm:$0xff]
  %v1092 = vld [vmem:[%s1090 + $0x8] sm:$0xff]
  %v1093 = vld [vmem:[%s1090 + $0x10] sm:$0xff]
  %1094 = vmatpush.msra.mxu0 %v276
  %1095 = vmatpush.msra.mxu0 %v273
  %1096 = vmatpush.msra.mxu0 %v270
  %1097 = vmatpush.msra.mxu0 %v267
  %1098 = vmatpush.msra.mxu0 %v264
  %1099 = vmatpush.msra.mxu0 %v261
  %1100 = vmatpush.msra.mxu0 %v258
  %1101 = vmatpush.msra.mxu0 %v255
  %1102 = vmatpush.msra.mxu0 %v252
  %1103 = vmatpush.msra.mxu0 %v249
  %1104 = vmatpush.msra.mxu0 %v246
  %1105 = vmatpush.msra.mxu0 %v243
  %1106 = vmatpush.msra.mxu0 %v240
  %1107 = vmatpush.msra.mxu0 %v237
  %1108 = vmatpush.msra.mxu0 %v234
  %1109 = vmatpush.msra.mxu0 %v231
  %1110 = vmatmul.f32.gmra.mxu0 %v1086
  %v1111 = vpop.f32.mrf.mxu0
  %v1112 = vadd.f32 0.0, %v1111
  %1113 = vdwg.mxu0
  %1114 = vmatpush.msra.mxu0 %v277
  %1115 = vmatpush.msra.mxu0 %v274
  %1116 = vmatpush.msra.mxu0 %v271
  %1117 = vmatpush.msra.mxu0 %v268
  %1118 = vmatpush.msra.mxu0 %v265
  %1119 = vmatpush.msra.mxu0 %v262
  %1120 = vmatpush.msra.mxu0 %v259
  %1121 = vmatpush.msra.mxu0 %v256
  %1122 = vmatpush.msra.mxu0 %v253
  %1123 = vmatpush.msra.mxu0 %v250
  %1124 = vmatpush.msra.mxu0 %v247
  %1125 = vmatpush.msra.mxu0 %v244
  %1126 = vmatpush.msra.mxu0 %v241
  %1127 = vmatpush.msra.mxu0 %v238
  %1128 = vmatpush.msra.mxu0 %v235
  %1129 = vmatpush.msra.mxu0 %v232
  %1130 = vmatmul.f32.gmra.mxu0 %v1086
  %v1131 = vpop.f32.mrf.mxu0
  %v1132 = vadd.f32 0.0, %v1131
  %1133 = vdwg.mxu0
  %1134 = vmatpush.msra.mxu0 %v278
  %1135 = vmatpush.msra.mxu0 %v275
  %1136 = vmatpush.msra.mxu0 %v272
  %1137 = vmatpush.msra.mxu0 %v269
  %1138 = vmatpush.msra.mxu0 %v266
  %1139 = vmatpush.msra.mxu0 %v263
  %1140 = vmatpush.msra.mxu0 %v260
  %1141 = vmatpush.msra.mxu0 %v257
  %1142 = vmatpush.msra.mxu0 %v254
  %1143 = vmatpush.msra.mxu0 %v251
  %1144 = vmatpush.msra.mxu0 %v248
  %1145 = vmatpush.msra.mxu0 %v245
  %1146 = vmatpush.msra.mxu0 %v242
  %1147 = vmatpush.msra.mxu0 %v239
  %1148 = vmatpush.msra.mxu0 %v236
  %1149 = vmatpush.msra.mxu0 %v233
  %1150 = vmatmul.f32.gmra.mxu0 %v1086
  %v1151 = vpop.f32.mrf.mxu0
  %v1152 = vadd.f32 0.0, %v1151
  %1153 = vdwg.mxu0
  %v1154 = vadd.f32 %v1091, %v1112
  %v1155 = vxor.u32 %v1154, 2147483648
  %v1156 = vmul.f32 %v1155, 1.442695
  %v1157 = vpow.pop %v1156
  %v1158 = vadd.f32 %v1157, 1.0
  %v1159 = vrcp.pop %v1158
  %v1160 = vmul.f32 %v1158, %v1159
  %v1161 = vsub.f32 1.0, %v1160
  %v1162 = vmul.f32 %v1159, %v1161
  %v1163 = vadd.f32 %v1159, %v1162
  %vm1164 = vweird.f32 %v1158
  %vm1165 = vweird.f32 %v1159
  %vm1166 = vmor %vm1164, %vm1165
  %v1167 = vsel %vm1166, %v1159, %v1163
  %v1168 = vand.u32 2147483647, %v1158
  %vm1169 = vcmp.eq.f32.partialorder %v1168, 8.507059e+37
  %v1170 = vand.u32 %v1158, 2147483648
  %v1171 = vor.u32 1.1754944e-38, %v1170
  %v1172 = vsel %vm1169, %v1171, %v1167
  %v1173 = vmul.f32 1.0, %v1172
  %v1174 = vadd.f32 %v1092, %v1132
  %v1175 = vxor.u32 %v1174, 2147483648
  %v1176 = vmul.f32 %v1175, 1.442695
  %v1177 = vpow.pop %v1176
  %v1178 = vadd.f32 %v1177, 1.0
  %v1179 = vrcp.pop %v1178
  %v1180 = vmul.f32 %v1178, %v1179
  %v1181 = vsub.f32 1.0, %v1180
  %v1182 = vmul.f32 %v1179, %v1181
  %v1183 = vadd.f32 %v1179, %v1182
  %vm1184 = vweird.f32 %v1178
  %vm1185 = vweird.f32 %v1179
  %vm1186 = vmor %vm1184, %vm1185
  %v1187 = vsel %vm1186, %v1179, %v1183
  %v1188 = vand.u32 2147483647, %v1178
  %vm1189 = vcmp.eq.f32.partialorder %v1188, 8.507059e+37
  %v1190 = vand.u32 %v1178, 2147483648
  %v1191 = vor.u32 1.1754944e-38, %v1190
  %v1192 = vsel %vm1189, %v1191, %v1187
  %v1193 = vmul.f32 1.0, %v1192
  %v1194 = vadd.f32 %v1152, %v387
  %v1195 = vmul.f32 %v1173, %v1194
  %v1196 = vadd.f32 %v1093, %v1195
  %v1197 = vtanh.pop %v1196
  %v1198 = vsub.f32 1.0, %v1193
  %v1199 = vmul.f32 %v1198, %v1197
  %v1200 = vmul.f32 %v1193, %v1086
  %v1201 = vadd.f32 %v1199, %v1200
  %1202 = vst [vmem:[%s1090] sm:$0xff] %v1201
  %v1203 = vld [vmem:[#allocation2] sm:$0xff]
  %v1204 = vld [vmem:[#allocation2 + $0x18] sm:$0xff]
  %v1205 = vld [vmem:[#allocation2 + $0x30] sm:$0xff]
  %v1206 = vld [vmem:[#allocation2 + $0x48] sm:$0xff]
  %v1207 = vld [vmem:[#allocation2 + $0x60] sm:$0xff]
  %v1208 = vld [vmem:[#allocation2 + $0x78] sm:$0xff]
  %v1209 = vld [vmem:[#allocation2 + $0x90] sm:$0xff]
  %v1210 = vld [vmem:[#allocation2 + $0xa8] sm:$0xff]
  %v1211 = vld [vmem:[%s5] sm:$0xff]
  %v1212 = vld [vmem:[%s5 + $0x8] sm:$0xff]
  %v1213 = vld [vmem:[%s5 + $0x10] sm:$0xff]
  %v1214 = vld [vmem:[%s5 + $0x18] sm:$0xff]
  %v1215 = vld [vmem:[%s5 + $0x20] sm:$0xff]
  %v1216 = vld [vmem:[%s5 + $0x28] sm:$0xff]
  %v1217 = vld [vmem:[%s5 + $0x30] sm:$0xff]
  %v1218 = vld [vmem:[%s5 + $0x38] sm:$0xff]
  %v1219 = vld [vmem:[%s5 + $0x40] sm:$0xff]
  %v1220 = vld [vmem:[%s5 + $0x48] sm:$0xff]
  %v1221 = vld [vmem:[%s5 + $0x50] sm:$0xff]
  %v1222 = vld [vmem:[%s5 + $0x58] sm:$0xff]
  %v1223 = vld [vmem:[%s5 + $0x60] sm:$0xff]
  %v1224 = vld [vmem:[%s5 + $0x68] sm:$0xff]
  %v1225 = vld [vmem:[%s5 + $0x70] sm:$0xff]
  %v1226 = vld [vmem:[%s5 + $0x78] sm:$0xff]
  %v1227 = vld [vmem:[%s6] sm:$0x1]
  %v1229 = vperm.slane %v1227, 0
  %1231 = vmatpush.msra.mxu0 %v1226
  %1232 = vmatpush.msra.mxu0 %v1225
  %1233 = vmatpush.msra.mxu0 %v1224
  %1234 = vmatpush.msra.mxu0 %v1223
  %1235 = vmatpush.msra.mxu0 %v1222
  %1236 = vmatpush.msra.mxu0 %v1221
  %1237 = vmatpush.msra.mxu0 %v1220
  %1238 = vmatpush.msra.mxu0 %v1219
  %1239 = vmatpush.msra.mxu0 %v1218
  %1240 = vmatpush.msra.mxu0 %v1217
  %1241 = vmatpush.msra.mxu0 %v1216
  %1242 = vmatpush.msra.mxu0 %v1215
  %1243 = vmatpush.msra.mxu0 %v1214
  %1244 = vmatpush.msra.mxu0 %v1213
  %1245 = vmatpush.msra.mxu0 %v1212
  %1246 = vmatpush.msra.mxu0 %v1211
  %1247 = vmatmul.f32.gmra.mxu0 %v1203
  %v1248 = vpop.f32.mrf.mxu0
  %v1249 = vadd.f32 %v1229, %v1248
  %1250 = vmatmul.f32.gmra.mxu0 %v1204
  %v1251 = vpop.f32.mrf.mxu0
  %v1252 = vadd.f32 %v1229, %v1251
  %1253 = vmatmul.f32.gmra.mxu0 %v1205
  %v1254 = vpop.f32.mrf.mxu0
  %v1255 = vadd.f32 %v1229, %v1254
  %1256 = vmatmul.f32.gmra.mxu0 %v1206
  %v1257 = vpop.f32.mrf.mxu0
  %v1258 = vadd.f32 %v1229, %v1257
  %1259 = vmatmul.f32.gmra.mxu0 %v1207
  %v1260 = vpop.f32.mrf.mxu0
  %v1261 = vadd.f32 %v1229, %v1260
  %1262 = vmatmul.f32.gmra.mxu0 %v1208
  %v1263 = vpop.f32.mrf.mxu0
  %v1264 = vadd.f32 %v1229, %v1263
  %1265 = vmatmul.f32.gmra.mxu0 %v1209
  %v1266 = vpop.f32.mrf.mxu0
  %v1267 = vadd.f32 %v1229, %v1266
  %1268 = vmatmul.f32.gmra.mxu0 %v1210
  %v1269 = vpop.f32.mrf.mxu0
  %v1270 = vadd.f32 %v1229, %v1269
  %1271 = vdwg.mxu0
  %v1272 = vxor.u32 %v1249, 2147483648
  %v1273 = vxor.u32 %v1252, 2147483648
  %v1274 = vxor.u32 %v1255, 2147483648
  %v1275 = vxor.u32 %v1258, 2147483648
  %v1276 = vxor.u32 %v1261, 2147483648
  %v1277 = vxor.u32 %v1264, 2147483648
  %v1278 = vxor.u32 %v1267, 2147483648
  %v1279 = vxor.u32 %v1270, 2147483648
  %v1280 = vmul.f32 %v1272, 1.442695
  %v1281 = vpow.pop %v1280
  %v1282 = vmul.f32 %v1273, 1.442695
  %v1283 = vpow.pop %v1282
  %v1284 = vmul.f32 %v1274, 1.442695
  %v1285 = vpow.pop %v1284
  %v1286 = vmul.f32 %v1275, 1.442695
  %v1287 = vpow.pop %v1286
  %v1288 = vmul.f32 %v1276, 1.442695
  %v1289 = vpow.pop %v1288
  %v1290 = vmul.f32 %v1277, 1.442695
  %v1291 = vpow.pop %v1290
  %v1292 = vmul.f32 %v1278, 1.442695
  %v1293 = vpow.pop %v1292
  %v1294 = vmul.f32 %v1279, 1.442695
  %v1295 = vpow.pop %v1294
  %v1296 = vadd.f32 %v1281, 1.0
  %v1297 = vadd.f32 %v1283, 1.0
  %v1298 = vadd.f32 %v1285, 1.0
  %v1299 = vadd.f32 %v1287, 1.0
  %v1300 = vadd.f32 %v1289, 1.0
  %v1301 = vadd.f32 %v1291, 1.0
  %v1302 = vadd.f32 %v1293, 1.0
  %v1303 = vadd.f32 %v1295, 1.0
  %v1304 = vrcp.pop %v1296
  %v1305 = vmul.f32 %v1296, %v1304
  %v1306 = vsub.f32 1.0, %v1305
  %v1307 = vmul.f32 %v1304, %v1306
  %v1308 = vadd.f32 %v1304, %v1307
  %vm1309 = vweird.f32 %v1296
  %vm1310 = vweird.f32 %v1304
  %vm1311 = vmor %vm1309, %vm1310
  %v1312 = vsel %vm1311, %v1304, %v1308
  %v1313 = vand.u32 2147483647, %v1296
  %vm1314 = vcmp.eq.f32.partialorder %v1313, 8.507059e+37
  %v1315 = vand.u32 %v1296, 2147483648
  %v1316 = vor.u32 1.1754944e-38, %v1315
  %v1317 = vsel %vm1314, %v1316, %v1312
  %v1318 = vmul.f32 1.0, %v1317
  %v1319 = vrcp.pop %v1297
  %v1320 = vmul.f32 %v1297, %v1319
  %v1321 = vsub.f32 1.0, %v1320
  %v1322 = vmul.f32 %v1319, %v1321
  %v1323 = vadd.f32 %v1319, %v1322
  %vm1324 = vweird.f32 %v1297
  %vm1325 = vweird.f32 %v1319
  %vm1326 = vmor %vm1324, %vm1325
  %v1327 = vsel %vm1326, %v1319, %v1323
  %v1328 = vand.u32 2147483647, %v1297
  %vm1329 = vcmp.eq.f32.partialorder %v1328, 8.507059e+37
  %v1330 = vand.u32 %v1297, 2147483648
  %v1331 = vor.u32 1.1754944e-38, %v1330
  %v1332 = vsel %vm1329, %v1331, %v1327
  %v1333 = vmul.f32 1.0, %v1332
  %v1334 = vrcp.pop %v1298
  %v1335 = vmul.f32 %v1298, %v1334
  %v1336 = vsub.f32 1.0, %v1335
  %v1337 = vmul.f32 %v1334, %v1336
  %v1338 = vadd.f32 %v1334, %v1337
  %vm1339 = vweird.f32 %v1298
  %vm1340 = vweird.f32 %v1334
  %vm1341 = vmor %vm1339, %vm1340
  %v1342 = vsel %vm1341, %v1334, %v1338
  %v1343 = vand.u32 2147483647, %v1298
  %vm1344 = vcmp.eq.f32.partialorder %v1343, 8.507059e+37
  %v1345 = vand.u32 %v1298, 2147483648
  %v1346 = vor.u32 1.1754944e-38, %v1345
  %v1347 = vsel %vm1344, %v1346, %v1342
  %v1348 = vmul.f32 1.0, %v1347
  %v1349 = vrcp.pop %v1299
  %v1350 = vmul.f32 %v1299, %v1349
  %v1351 = vsub.f32 1.0, %v1350
  %v1352 = vmul.f32 %v1349, %v1351
  %v1353 = vadd.f32 %v1349, %v1352
  %vm1354 = vweird.f32 %v1299
  %vm1355 = vweird.f32 %v1349
  %vm1356 = vmor %vm1354, %vm1355
  %v1357 = vsel %vm1356, %v1349, %v1353
  %v1358 = vand.u32 2147483647, %v1299
  %vm1359 = vcmp.eq.f32.partialorder %v1358, 8.507059e+37
  %v1360 = vand.u32 %v1299, 2147483648
  %v1361 = vor.u32 1.1754944e-38, %v1360
  %v1362 = vsel %vm1359, %v1361, %v1357
  %v1363 = vmul.f32 1.0, %v1362
  %v1364 = vrcp.pop %v1300
  %v1365 = vmul.f32 %v1300, %v1364
  %v1366 = vsub.f32 1.0, %v1365
  %v1367 = vmul.f32 %v1364, %v1366
  %v1368 = vadd.f32 %v1364, %v1367
  %vm1369 = vweird.f32 %v1300
  %vm1370 = vweird.f32 %v1364
  %vm1371 = vmor %vm1369, %vm1370
  %v1372 = vsel %vm1371, %v1364, %v1368
  %v1373 = vand.u32 2147483647, %v1300
  %vm1374 = vcmp.eq.f32.partialorder %v1373, 8.507059e+37
  %v1375 = vand.u32 %v1300, 2147483648
  %v1376 = vor.u32 1.1754944e-38, %v1375
  %v1377 = vsel %vm1374, %v1376, %v1372
  %v1378 = vmul.f32 1.0, %v1377
  %v1379 = vrcp.pop %v1301
  %v1380 = vmul.f32 %v1301, %v1379
  %v1381 = vsub.f32 1.0, %v1380
  %v1382 = vmul.f32 %v1379, %v1381
  %v1383 = vadd.f32 %v1379, %v1382
  %vm1384 = vweird.f32 %v1301
  %vm1385 = vweird.f32 %v1379
  %vm1386 = vmor %vm1384, %vm1385
  %v1387 = vsel %vm1386, %v1379, %v1383
  %v1388 = vand.u32 2147483647, %v1301
  %vm1389 = vcmp.eq.f32.partialorder %v1388, 8.507059e+37
  %v1390 = vand.u32 %v1301, 2147483648
  %v1391 = vor.u32 1.1754944e-38, %v1390
  %v1392 = vsel %vm1389, %v1391, %v1387
  %v1393 = vmul.f32 1.0, %v1392
  %v1394 = vrcp.pop %v1302
  %v1395 = vmul.f32 %v1302, %v1394
  %v1396 = vsub.f32 1.0, %v1395
  %v1397 = vmul.f32 %v1394, %v1396
  %v1398 = vadd.f32 %v1394, %v1397
  %vm1399 = vweird.f32 %v1302
  %vm1400 = vweird.f32 %v1394
  %vm1401 = vmor %vm1399, %vm1400
  %v1402 = vsel %vm1401, %v1394, %v1398
  %v1403 = vand.u32 2147483647, %v1302
  %vm1404 = vcmp.eq.f32.partialorder %v1403, 8.507059e+37
  %v1405 = vand.u32 %v1302, 2147483648
  %v1406 = vor.u32 1.1754944e-38, %v1405
  %v1407 = vsel %vm1404, %v1406, %v1402
  %v1408 = vmul.f32 1.0, %v1407
  %v1409 = vrcp.pop %v1303
  %v1410 = vmul.f32 %v1303, %v1409
  %v1411 = vsub.f32 1.0, %v1410
  %v1412 = vmul.f32 %v1409, %v1411
  %v1413 = vadd.f32 %v1409, %v1412
  %vm1414 = vweird.f32 %v1303
  %vm1415 = vweird.f32 %v1409
  %vm1416 = vmor %vm1414, %vm1415
  %v1417 = vsel %vm1416, %v1409, %v1413
  %v1418 = vand.u32 2147483647, %v1303
  %vm1419 = vcmp.eq.f32.partialorder %v1418, 8.507059e+37
  %v1420 = vand.u32 %v1303, 2147483648
  %v1421 = vor.u32 1.1754944e-38, %v1420
  %v1422 = vsel %vm1419, %v1421, %v1417
  %v1423 = vmul.f32 1.0, %v1422
  %1424 = vst [vmem:[%s7] sm:$0xff] %v1318
  %1425 = vst [vmem:[%s7 + $0x8] sm:$0xff] %v1333
  %1426 = vst [vmem:[%s7 + $0x10] sm:$0xff] %v1348
  %1427 = vst [vmem:[%s7 + $0x18] sm:$0xff] %v1363
  %1428 = vst [vmem:[%s7 + $0x20] sm:$0xff] %v1378
  %1429 = vst [vmem:[%s7 + $0x28] sm:$0xff] %v1393
  %1430 = vst [vmem:[%s7 + $0x30] sm:$0xff] %v1408
  %1431 = vst [vmem:[%s7 + $0x38] sm:$0xff] %v1423
  // Predicated region
  $region30: #{discriminator_forward.1} parent=0 // pred_check
    _
  $region31: #{discriminator_forward.1} parent=0 // pred_check_branch
    %1433 = sbr.rel (0) target = $region33
  $region32: #{discriminator_forward.1} parent=0 // pred_region
    _
  $region33: #{discriminator_forward.1} parent=0 // pred_fallthru
    _
  // Predicated region
  $region34: #{discriminator_forward.1} parent=0 // pred_check
    _
  $region35: #{discriminator_forward.1} parent=0 // pred_check_branch
    %1435 = sbr.rel (0) target = $region37
  $region36: #{discriminator_forward.1} parent=0 // pred_region
    _
  $region37: #{discriminator_forward.1} parent=0 // pred_fallthru
    _

</llo_original>
